<compile_context>
chip_gen: v6e
topology: v6e:2x2x1
jax: 0.10.0
libtpu: 0.0.40
codegen_flags: <defaults>
</compile_context>

<pallas_src>
import jax
import jax.numpy as jnp
from jax import lax
from jax.experimental import pallas as pl
from jax.experimental.pallas import tpu as pltpu


# ----------------------------- Pallas kernel -------------------------------
def _lstm_dir_kernel(x_ref, wih_ref, b_ref, whh_ref,
                     out_ref, hN_ref, cN_ref, gates_sc):
    """One LSTM direction, selected by pl.program_id(0) (0 = fwd, 1 = rev).

    x_ref   : (T*Bp, E)   embeddings, already in THIS direction's time order
    wih_ref : (E, 4H)     W_ih^T, PyTorch gate order [i | f | g | o]
    b_ref   : (1, 4H)     b_ih + b_hh
    whh_ref : (H, 4H)     W_hh^T (dense, no zero blocks)
    out_ref : (T*Bp, H)   hidden states, rows in ORIGINAL time order
    hN_ref  : (Bp, H)     final hidden state
    cN_ref  : (Bp, H)     final cell state
    gates_sc: (T*Bp, 4H)  scratch for the hoisted input projection
    """
    TB, _ = x_ref.shape
    Bp, H = hN_ref.shape
    T = TB // Bp
    H2, H3 = 2 * H, 3 * H
    d = pl.program_id(0)                       # direction: 0 forward, 1 reverse

    # ---- Phase 1: hoisted input projection — one MXU call for all T steps ----
    gates_sc[...] = (
        jnp.dot(x_ref[...], wih_ref[...], preferred_element_type=jnp.float32)
        + b_ref[...])

    # ---- Phase 2: serial recurrence ----
    def step(t, carry):
        h, c = carry

        # Contiguous, sublane-aligned load of this step's input gates.
        row_in = pl.multiple_of(t * Bp, 8)
        g = gates_sc[pl.ds(row_in, Bp), :] + jnp.dot(
            h, whh_ref[...], preferred_element_type=jnp.float32)       # (Bp, 4H)

        # Three wide activations (PyTorch gate order [i, f, g, o]).
        s_if = jax.nn.sigmoid(g[:, :H2])        # i | f  (2H wide)
        g_g = jnp.tanh(g[:, H2:H3])             # g
        s_o = jax.nn.sigmoid(g[:, H3:])         # o

        c_new = s_if[:, H:] * c + s_if[:, :H] * g_g
        h_new = s_o * jnp.tanh(c_new)

        # Write in ORIGINAL time order: row block t for fwd, T-1-t for rev.
        t_out = d * (T - 1) + (1 - 2 * d) * t
        row_out = pl.multiple_of(t_out * Bp, 8)
        out_ref[pl.ds(row_out, Bp), :] = h_new.astype(out_ref.dtype)
        return h_new, c_new

    z = jnp.zeros((Bp, H), jnp.float32)
    unroll = T if T <= 16 else 4                # partial unroll for long sequences
    h, c = lax.fori_loop(0, T, step, (z, z), unroll=unroll)

    hN_ref[...] = h.astype(hN_ref.dtype)
    cN_ref[...] = c.astype(cN_ref.dtype)


# ----------------------------- Encoder module ------------------------------
def init_encoder_params(key, vocab_size, embed_size, hidden_size):
    ks = jax.random.split(key, 9)
    k = 1.0 / jnp.sqrt(hidden_size)
    u = lambda kk, shape: jax.random.uniform(kk, shape, jnp.float32, -k, k)
    return {
        "embedding": jax.random.normal(ks[0], (vocab_size, embed_size), jnp.float32),
        # forward direction
        "w_ih_f": u(ks[1], (4 * hidden_size, embed_size)),
        "w_hh_f": u(ks[2], (4 * hidden_size, hidden_size)),
        "b_ih_f": u(ks[3], (4 * hidden_size,)),
        "b_hh_f": u(ks[4], (4 * hidden_size,)),
        # reverse direction
        "w_ih_r": u(ks[5], (4 * hidden_size, embed_size)),
        "w_hh_r": u(ks[6], (4 * hidden_size, hidden_size)),
        "b_ih_r": u(ks[7], (4 * hidden_size,)),
        "b_hh_r": u(ks[8], (4 * hidden_size,)),
    }


def encoder_forward(params, x):
    """x: (B, T) int32 tokens. Returns (output, (h_n, c_n)) like PyTorch."""
    B, T = x.shape
    E = params["embedding"].shape[1]
    H = params["w_hh_f"].shape[1]
    H4 = 4 * H
    Bp = ((B + 7) // 8) * 8                       # pad batch to sublane width

    # Token ids, time-major, batch padded with id 0 (finite rows, sliced off later).
    ids_tm = jnp.zeros((T, Bp), dtype=jnp.int32).at[:, :B].set(x.astype(jnp.int32).T)
    ids_f = ids_tm.reshape(-1)                    # forward time order
    ids_r = ids_tm[::-1].reshape(-1)              # reversed time order (rev recurrence order)

    # Embedding gather (XLA); reversing the gather indices makes the reverse
    # direction's gates land in recurrence order for free.
    # TODO(synk): for reused weights / small vocab, the table (or even table @ W_ih)
    # could live in VMEM and the gather move inside the kernel via scalar prefetch.
    emb_tbl = params["embedding"].astype(jnp.float32)
    xs = jnp.stack([jnp.take(emb_tbl, ids_f, axis=0),
                    jnp.take(emb_tbl, ids_r, axis=0)], axis=0)          # (2, T*Bp, E)

    wih = jnp.stack([params["w_ih_f"].T, params["w_ih_r"].T], 0).astype(jnp.float32)   # (2, E, 4H)
    whh = jnp.stack([params["w_hh_f"].T, params["w_hh_r"].T], 0).astype(jnp.float32)   # (2, H, 4H)
    bias = jnp.stack([params["b_ih_f"] + params["b_hh_f"],
                      params["b_ih_r"] + params["b_hh_r"]], 0
                     ).reshape(2, 1, H4).astype(jnp.float32)                            # (2, 1, 4H)

    # Explicit VMEM budget (v7x: 64 MiB physical / 32 MiB scoped default).
    f32 = 4
    est = f32 * (2 * (T * Bp * E + E * H4 + H4 + H * H4)      # double-buffered inputs
                 + 2 * (T * Bp * H + 2 * Bp * H)              # double-buffered outputs
                 + T * Bp * H4)                               # gates scratch
    vmem_limit = int(min(96 * 2**20, max(16 * 2**20, 4 * est)))

    grid_spec = pltpu.PrefetchScalarGridSpec(
        num_scalar_prefetch=0,
        grid=(2,),                                            # one direction per grid step
        in_specs=[
            pl.BlockSpec((pl.Squeezed(), T * Bp, E), lambda d: (d, 0, 0)),
            pl.BlockSpec((pl.Squeezed(), E, H4), lambda d: (d, 0, 0)),
            pl.BlockSpec((pl.Squeezed(), 1, H4), lambda d: (d, 0, 0)),
            pl.BlockSpec((pl.Squeezed(), H, H4), lambda d: (d, 0, 0)),
        ],
        out_specs=[
            pl.BlockSpec((pl.Squeezed(), T * Bp, H), lambda d: (d, 0, 0)),
            pl.BlockSpec((pl.Squeezed(), Bp, H), lambda d: (d, 0, 0)),
            pl.BlockSpec((pl.Squeezed(), Bp, H), lambda d: (d, 0, 0)),
        ],
        scratch_shapes=[pltpu.VMEM((T * Bp, H4), jnp.float32)],
    )

    out_d, h_n_p, c_n_p = pl.pallas_call(
        _lstm_dir_kernel,
        out_shape=(
            jax.ShapeDtypeStruct((2, T * Bp, H), jnp.float32),
            jax.ShapeDtypeStruct((2, Bp, H), jnp.float32),
            jax.ShapeDtypeStruct((2, Bp, H), jnp.float32),
        ),
        grid_spec=grid_spec,
        compiler_params=pltpu.CompilerParams(
            dimension_semantics=("parallel",),     # directions split across TCs on v7x
            vmem_limit_bytes=vmem_limit),
    )(xs, wih, bias, whh)

    # (2, T*Bp, H) -> (2, T, B, H) -> (B, T, 2H); drop padded batch rows.
    out = out_d.reshape(2, T, Bp, H)[:, :, :B, :]
    output = jnp.concatenate([out[0], out[1]], axis=-1).transpose(1, 0, 2)
    h_n = h_n_p[:, :B, :]
    c_n = c_n_p[:, :B, :]
    return output, (h_n, c_n)


# ----------------------------- pure-JAX reference --------------------------
def _ref_direction(emb_bte, w_ih, w_hh, b_ih, b_hh, reverse):
    B, T, E = emb_bte.shape
    H = w_ih.shape[0] // 4
    xs = jnp.transpose(emb_bte, (1, 0, 2))
    if reverse:
        xs = xs[::-1]

    def step(carry, xt):
        h, c = carry
        g = xt @ w_ih.T + h @ w_hh.T + b_ih + b_hh
        i, f, gg, o = jnp.split(g, 4, axis=-1)
        i, f, o = jax.nn.sigmoid(i), jax.nn.sigmoid(f), jax.nn.sigmoid(o)
        gg = jnp.tanh(gg)
        c = f * c + i * gg
        h = o * jnp.tanh(c)
        return (h, c), h

    (hN, cN), hs = lax.scan(step, (jnp.zeros((B, H)), jnp.zeros((B, H))), xs)
    if reverse:
        hs = hs[::-1]
    return jnp.transpose(hs, (1, 0, 2)), hN, cN


def encoder_ref(params, x):
    embedded = jnp.take(params["embedding"], x, axis=0)
    of, hf, cf = _ref_direction(embedded, params["w_ih_f"], params["w_hh_f"],
                                params["b_ih_f"], params["b_hh_f"], False)
    orr, hr, cr = _ref_direction(embedded, params["w_ih_r"], params["w_hh_r"],
                                 params["b_ih_r"], params["b_hh_r"], True)
    return (jnp.concatenate([of, orr], axis=-1),
            (jnp.stack([hf, hr], 0), jnp.stack([cf, cr], 0)))


# ----------------------------------- main -----------------------------------
if __name__ == "__main__":
    B, T = 2, 8
    vocab_size, embed_size, hidden_size = 20, 32, 32

    key = jax.random.PRNGKey(0)
    kp, kx = jax.random.split(key)
    params = init_encoder_params(kp, vocab_size, embed_size, hidden_size)
    x = jax.random.randint(kx, (B, T), 0, vocab_size, dtype=jnp.int32)

    fwd = jax.jit(encoder_forward)
    output, (h_n, c_n) = jax.block_until_ready(fwd(params, x))

    # sanity check vs pure-JAX reference
    ref_out, (ref_h, ref_c) = jax.block_until_ready(encoder_ref(params, x))
    assert output.shape == (B, T, 2 * hidden_size)
    assert h_n.shape == (2, B, hidden_size) and c_n.shape == (2, B, hidden_size)
    assert jnp.allclose(output, ref_out, atol=2e-3, rtol=2e-3)
    assert jnp.allclose(h_n, ref_h, atol=2e-3, rtol=2e-3)
    assert jnp.allclose(c_n, ref_c, atol=2e-3, rtol=2e-3)

    print("KERNEL_OK")
</pallas_src>

<mosaic_0001>
module attributes {stable_mosaic.version = 11 : i64} {
  func.func @_lstm_dir_kernel(%arg0: i32, %arg1: memref<1x64x32xf32, #tpu.memory_space<vmem>>, %arg2: memref<1x32x128xf32, #tpu.memory_space<vmem>>, %arg3: memref<1x1x128xf32, #tpu.memory_space<vmem>>, %arg4: memref<1x32x128xf32, #tpu.memory_space<vmem>>, %arg5: memref<1x64x32xf32, #tpu.memory_space<vmem>>, %arg6: memref<1x8x32xf32, #tpu.memory_space<vmem>>, %arg7: memref<1x8x32xf32, #tpu.memory_space<vmem>>, %arg8: memref<64x128xf32, #tpu.memory_space<vmem>>) attributes {dimension_semantics = [#tpu.dimension_semantics<parallel>], iteration_bounds = array<i64: 2>, scalar_prefetch = 0 : i64, scratch_operands = 1 : i64, tpu.core_type = #tpu.core_type<tc>, window_params = [{transform_indices = @transform_0, window_bounds = array<i64: 1, 64, 32>}, {transform_indices = @transform_1, window_bounds = array<i64: 1, 32, 128>}, {transform_indices = @transform_2, window_bounds = array<i64: 1, 1, 128>}, {transform_indices = @transform_3, window_bounds = array<i64: 1, 32, 128>}, {transform_indices = @transform_4, window_bounds = array<i64: 1, 64, 32>}, {transform_indices = @transform_5, window_bounds = array<i64: 1, 8, 32>}, {transform_indices = @transform_6, window_bounds = array<i64: 1, 8, 32>}]} {
    %c0 = arith.constant 0 : index
    %c0_0 = arith.constant 0 : index
    %c0_1 = arith.constant 0 : index
    %0 = vector.load %arg1[%c0, %c0_0, %c0_1] : memref<1x64x32xf32, #tpu.memory_space<vmem>>, vector<1x64x32xf32>
    %1 = vector.shape_cast %0 : vector<1x64x32xf32> to vector<64x32xf32>
    %c0_2 = arith.constant 0 : index
    %c0_3 = arith.constant 0 : index
    %c0_4 = arith.constant 0 : index
    %2 = vector.load %arg2[%c0_2, %c0_3, %c0_4] : memref<1x32x128xf32, #tpu.memory_space<vmem>>, vector<1x32x128xf32>
    %3 = vector.shape_cast %2 : vector<1x32x128xf32> to vector<32x128xf32>
    %cst = arith.constant dense<0.000000e+00> : vector<64x128xf32>
    %4 = tpu.matmul %1, %3, %cst {dimension_numbers = #tpu.dot_dimension_numbers<[1], [0], [0], [1], [0, 0, 1, 1], [], []>} : vector<64x32xf32>, vector<32x128xf32>, vector<64x128xf32> -> vector<64x128xf32>
    %c0_5 = arith.constant 0 : index
    %c0_6 = arith.constant 0 : index
    %c0_7 = arith.constant 0 : index
    %5 = vector.load %arg3[%c0_5, %c0_6, %c0_7] : memref<1x1x128xf32, #tpu.memory_space<vmem>>, vector<1x1x128xf32>
    %6 = vector.shape_cast %5 : vector<1x1x128xf32> to vector<1x128xf32>
    %7 = vector.broadcast %6 : vector<1x128xf32> to vector<64x128xf32>
    %8 = arith.addf %4, %7 : vector<64x128xf32>
    %c0_8 = arith.constant 0 : index
    %c0_9 = arith.constant 0 : index
    %9 = vector.load %arg8[%c0_8, %c0_9] : memref<64x128xf32, #tpu.memory_space<vmem>>, vector<64x128xf32>
    tpu.vector_store %arg8[%c0_8, %c0_9], %8 {strides = array<i32>} : memref<64x128xf32, #tpu.memory_space<vmem>>, vector<64x128xf32>,
    %cst_10 = arith.constant 0.000000e+00 : f32
    %10 = vector.broadcast %cst_10 : f32 to vector<8x32xf32>
    %c0_i32 = arith.constant 0 : i32
    %c8_i32 = arith.constant 8 : i32
    %11 = arith.muli %c0_i32, %c8_i32 : i32
    %12 = tpu.assume_multiple %11, 8 : i32
    %13 = arith.index_cast %12 : i32 to index
    %c0_11 = arith.constant 0 : index
    %14 = vector.load %arg8[%13, %c0_11] : memref<64x128xf32, #tpu.memory_space<vmem>>, vector<8x128xf32>
    %c0_12 = arith.constant 0 : index
    %c0_13 = arith.constant 0 : index
    %c0_14 = arith.constant 0 : index
    %15 = vector.load %arg4[%c0_12, %c0_13, %c0_14] : memref<1x32x128xf32, #tpu.memory_space<vmem>>, vector<1x32x128xf32>
    %16 = vector.shape_cast %15 : vector<1x32x128xf32> to vector<32x128xf32>
    %cst_15 = arith.constant dense<0.000000e+00> : vector<8x128xf32>
    %17 = tpu.matmul %10, %16, %cst_15 {dimension_numbers = #tpu.dot_dimension_numbers<[1], [0], [0], [1], [0, 0, 1, 1], [], []>} : vector<8x32xf32>, vector<32x128xf32>, vector<8x128xf32> -> vector<8x128xf32>
    %18 = arith.addf %14, %17 : vector<8x128xf32>
    %19 = vector.extract_strided_slice %18 {offsets = [0, 0], sizes = [8, 64], strides = [1, 1]} : vector<8x128xf32> to vector<8x64xf32>
    %20 = arith.negf %19 : vector<8x64xf32>
    %21 = math.exp %20 : vector<8x64xf32>
    %cst_16 = arith.constant 1.000000e+00 : f32
    %22 = vector.broadcast %cst_16 : f32 to vector<8x64xf32>
    %23 = arith.addf %22, %21 : vector<8x64xf32>
    %24 = arith.divf %22, %23 : vector<8x64xf32>
    %25 = vector.extract_strided_slice %18 {offsets = [0, 64], sizes = [8, 32], strides = [1, 1]} : vector<8x128xf32> to vector<8x32xf32>
    %26 = math.tanh %25 : vector<8x32xf32>
    %27 = vector.extract_strided_slice %18 {offsets = [0, 96], sizes = [8, 32], strides = [1, 1]} : vector<8x128xf32> to vector<8x32xf32>
    %28 = arith.negf %27 : vector<8x32xf32>
    %29 = math.exp %28 : vector<8x32xf32>
    %cst_17 = arith.constant 1.000000e+00 : f32
    %30 = vector.broadcast %cst_17 : f32 to vector<8x32xf32>
    %31 = arith.addf %30, %29 : vector<8x32xf32>
    %32 = arith.divf %30, %31 : vector<8x32xf32>
    %33 = vector.extract_strided_slice %24 {offsets = [0, 32], sizes = [8, 32], strides = [1, 1]} : vector<8x64xf32> to vector<8x32xf32>
    %34 = arith.mulf %33, %10 : vector<8x32xf32>
    %35 = vector.extract_strided_slice %24 {offsets = [0, 0], sizes = [8, 32], strides = [1, 1]} : vector<8x64xf32> to vector<8x32xf32>
    %36 = arith.mulf %35, %26 : vector<8x32xf32>
    %37 = arith.addf %34, %36 : vector<8x32xf32>
    %38 = math.tanh %37 : vector<8x32xf32>
    %39 = arith.mulf %32, %38 : vector<8x32xf32>
    %c7_i32 = arith.constant 7 : i32
    %40 = arith.muli %arg0, %c7_i32 : i32
    %c2_i32 = arith.constant 2 : i32
    %41 = arith.muli %c2_i32, %arg0 : i32
    %c1_i32 = arith.constant 1 : i32
    %42 = arith.subi %c1_i32, %41 : i32
    %43 = arith.muli %42, %c0_i32 : i32
    %44 = arith.addi %40, %43 : i32
    %c8_i32_18 = arith.constant 8 : i32
    %45 = arith.muli %44, %c8_i32_18 : i32
    %46 = tpu.assume_multiple %45, 8 : i32
    %c0_19 = arith.constant 0 : index
    %47 = arith.index_cast %46 : i32 to index
    %c0_20 = arith.constant 0 : index
    %48 = vector.load %arg5[%c0_19, %47, %c0_20] : memref<1x64x32xf32, #tpu.memory_space<vmem>>, vector<1x8x32xf32>
    %49 = vector.shape_cast %48 : vector<1x8x32xf32> to vector<8x32xf32>
    %50 = vector.shape_cast %39 : vector<8x32xf32> to vector<1x8x32xf32>
    tpu.vector_store %arg5[%c0_19, %47, %c0_20], %50 {strides = array<i32>} : memref<1x64x32xf32, #tpu.memory_space<vmem>>, vector<1x8x32xf32>,
    %c1_i32_21 = arith.constant 1 : i32
    %c8_i32_22 = arith.constant 8 : i32
    %51 = arith.muli %c1_i32_21, %c8_i32_22 : i32
    %52 = tpu.assume_multiple %51, 8 : i32
    %53 = arith.index_cast %52 : i32 to index
    %c0_23 = arith.constant 0 : index
    %54 = vector.load %arg8[%53, %c0_23] : memref<64x128xf32, #tpu.memory_space<vmem>>, vector<8x128xf32>
    %c0_24 = arith.constant 0 : index
    %c0_25 = arith.constant 0 : index
    %c0_26 = arith.constant 0 : index
    %55 = vector.load %arg4[%c0_24, %c0_25, %c0_26] : memref<1x32x128xf32, #tpu.memory_space<vmem>>, vector<1x32x128xf32>
    %56 = vector.shape_cast %55 : vector<1x32x128xf32> to vector<32x128xf32>
    %cst_27 = arith.constant dense<0.000000e+00> : vector<8x128xf32>
    %57 = tpu.matmul %39, %56, %cst_27 {dimension_numbers = #tpu.dot_dimension_numbers<[1], [0], [0], [1], [0, 0, 1, 1], [], []>} : vector<8x32xf32>, vector<32x128xf32>, vector<8x128xf32> -> vector<8x128xf32>
    %58 = arith.addf %54, %57 : vector<8x128xf32>
    %59 = vector.extract_strided_slice %58 {offsets = [0, 0], sizes = [8, 64], strides = [1, 1]} : vector<8x128xf32> to vector<8x64xf32>
    %60 = arith.negf %59 : vector<8x64xf32>
    %61 = math.exp %60 : vector<8x64xf32>
    %cst_28 = arith.constant 1.000000e+00 : f32
    %62 = vector.broadcast %cst_28 : f32 to vector<8x64xf32>
    %63 = arith.addf %62, %61 : vector<8x64xf32>
    %64 = arith.divf %62, %63 : vector<8x64xf32>
    %65 = vector.extract_strided_slice %58 {offsets = [0, 64], sizes = [8, 32], strides = [1, 1]} : vector<8x128xf32> to vector<8x32xf32>
    %66 = math.tanh %65 : vector<8x32xf32>
    %67 = vector.extract_strided_slice %58 {offsets = [0, 96], sizes = [8, 32], strides = [1, 1]} : vector<8x128xf32> to vector<8x32xf32>
    %68 = arith.negf %67 : vector<8x32xf32>
    %69 = math.exp %68 : vector<8x32xf32>
    %cst_29 = arith.constant 1.000000e+00 : f32
    %70 = vector.broadcast %cst_29 : f32 to vector<8x32xf32>
    %71 = arith.addf %70, %69 : vector<8x32xf32>
    %72 = arith.divf %70, %71 : vector<8x32xf32>
    %73 = vector.extract_strided_slice %64 {offsets = [0, 32], sizes = [8, 32], strides = [1, 1]} : vector<8x64xf32> to vector<8x32xf32>
    %74 = arith.mulf %73, %37 : vector<8x32xf32>
    %75 = vector.extract_strided_slice %64 {offsets = [0, 0], sizes = [8, 32], strides = [1, 1]} : vector<8x64xf32> to vector<8x32xf32>
    %76 = arith.mulf %75, %66 : vector<8x32xf32>
    %77 = arith.addf %74, %76 : vector<8x32xf32>
    %78 = math.tanh %77 : vector<8x32xf32>
    %79 = arith.mulf %72, %78 : vector<8x32xf32>
    %c7_i32_30 = arith.constant 7 : i32
    %80 = arith.muli %arg0, %c7_i32_30 : i32
    %c2_i32_31 = arith.constant 2 : i32
    %81 = arith.muli %c2_i32_31, %arg0 : i32
    %c1_i32_32 = arith.constant 1 : i32
    %82 = arith.subi %c1_i32_32, %81 : i32
    %83 = arith.muli %82, %c1_i32_21 : i32
    %84 = arith.addi %80, %83 : i32
    %c8_i32_33 = arith.constant 8 : i32
    %85 = arith.muli %84, %c8_i32_33 : i32
    %86 = tpu.assume_multiple %85, 8 : i32
    %c0_34 = arith.constant 0 : index
    %87 = arith.index_cast %86 : i32 to index
    %c0_35 = arith.constant 0 : index
    %88 = vector.load %arg5[%c0_34, %87, %c0_35] : memref<1x64x32xf32, #tpu.memory_space<vmem>>, vector<1x8x32xf32>
    %89 = vector.shape_cast %88 : vector<1x8x32xf32> to vector<8x32xf32>
    %90 = vector.shape_cast %79 : vector<8x32xf32> to vector<1x8x32xf32>
    tpu.vector_store %arg5[%c0_34, %87, %c0_35], %90 {strides = array<i32>} : memref<1x64x32xf32, #tpu.memory_space<vmem>>, vector<1x8x32xf32>,
    %c2_i32_36 = arith.constant 2 : i32
    %c8_i32_37 = arith.constant 8 : i32
    %91 = arith.muli %c2_i32_36, %c8_i32_37 : i32
    %92 = tpu.assume_multiple %91, 8 : i32
    %93 = arith.index_cast %92 : i32 to index
    %c0_38 = arith.constant 0 : index
    %94 = vector.load %arg8[%93, %c0_38] : memref<64x128xf32, #tpu.memory_space<vmem>>, vector<8x128xf32>
    %c0_39 = arith.constant 0 : index
    %c0_40 = arith.constant 0 : index
    %c0_41 = arith.constant 0 : index
    %95 = vector.load %arg4[%c0_39, %c0_40, %c0_41] : memref<1x32x128xf32, #tpu.memory_space<vmem>>, vector<1x32x128xf32>
    %96 = vector.shape_cast %95 : vector<1x32x128xf32> to vector<32x128xf32>
    %cst_42 = arith.constant dense<0.000000e+00> : vector<8x128xf32>
    %97 = tpu.matmul %79, %96, %cst_42 {dimension_numbers = #tpu.dot_dimension_numbers<[1], [0], [0], [1], [0, 0, 1, 1], [], []>} : vector<8x32xf32>, vector<32x128xf32>, vector<8x128xf32> -> vector<8x128xf32>
    %98 = arith.addf %94, %97 : vector<8x128xf32>
    %99 = vector.extract_strided_slice %98 {offsets = [0, 0], sizes = [8, 64], strides = [1, 1]} : vector<8x128xf32> to vector<8x64xf32>
    %100 = arith.negf %99 : vector<8x64xf32>
    %101 = math.exp %100 : vector<8x64xf32>
    %cst_43 = arith.constant 1.000000e+00 : f32
    %102 = vector.broadcast %cst_43 : f32 to vector<8x64xf32>
    %103 = arith.addf %102, %101 : vector<8x64xf32>
    %104 = arith.divf %102, %103 : vector<8x64xf32>
    %105 = vector.extract_strided_slice %98 {offsets = [0, 64], sizes = [8, 32], strides = [1, 1]} : vector<8x128xf32> to vector<8x32xf32>
    %106 = math.tanh %105 : vector<8x32xf32>
    %107 = vector.extract_strided_slice %98 {offsets = [0, 96], sizes = [8, 32], strides = [1, 1]} : vector<8x128xf32> to vector<8x32xf32>
    %108 = arith.negf %107 : vector<8x32xf32>
    %109 = math.exp %108 : vector<8x32xf32>
    %cst_44 = arith.constant 1.000000e+00 : f32
    %110 = vector.broadcast %cst_44 : f32 to vector<8x32xf32>
    %111 = arith.addf %110, %109 : vector<8x32xf32>
    %112 = arith.divf %110, %111 : vector<8x32xf32>
    %113 = vector.extract_strided_slice %104 {offsets = [0, 32], sizes = [8, 32], strides = [1, 1]} : vector<8x64xf32> to vector<8x32xf32>
    %114 = arith.mulf %113, %77 : vector<8x32xf32>
    %115 = vector.extract_strided_slice %104 {offsets = [0, 0], sizes = [8, 32], strides = [1, 1]} : vector<8x64xf32> to vector<8x32xf32>
    %116 = arith.mulf %115, %106 : vector<8x32xf32>
    %117 = arith.addf %114, %116 : vector<8x32xf32>
    %118 = math.tanh %117 : vector<8x32xf32>
    %119 = arith.mulf %112, %118 : vector<8x32xf32>
    %c7_i32_45 = arith.constant 7 : i32
    %120 = arith.muli %arg0, %c7_i32_45 : i32
    %c2_i32_46 = arith.constant 2 : i32
    %121 = arith.muli %c2_i32_46, %arg0 : i32
    %c1_i32_47 = arith.constant 1 : i32
    %122 = arith.subi %c1_i32_47, %121 : i32
    %123 = arith.muli %122, %c2_i32_36 : i32
    %124 = arith.addi %120, %123 : i32
    %c8_i32_48 = arith.constant 8 : i32
    %125 = arith.muli %124, %c8_i32_48 : i32
    %126 = tpu.assume_multiple %125, 8 : i32
    %c0_49 = arith.constant 0 : index
    %127 = arith.index_cast %126 : i32 to index
    %c0_50 = arith.constant 0 : index
    %128 = vector.load %arg5[%c0_49, %127, %c0_50] : memref<1x64x32xf32, #tpu.memory_space<vmem>>, vector<1x8x32xf32>
    %129 = vector.shape_cast %128 : vector<1x8x32xf32> to vector<8x32xf32>
    %130 = vector.shape_cast %119 : vector<8x32xf32> to vector<1x8x32xf32>
    tpu.vector_store %arg5[%c0_49, %127, %c0_50], %130 {strides = array<i32>} : memref<1x64x32xf32, #tpu.memory_space<vmem>>, vector<1x8x32xf32>,
    %c3_i32 = arith.constant 3 : i32
    %c8_i32_51 = arith.constant 8 : i32
    %131 = arith.muli %c3_i32, %c8_i32_51 : i32
    %132 = tpu.assume_multiple %131, 8 : i32
    %133 = arith.index_cast %132 : i32 to index
    %c0_52 = arith.constant 0 : index
    %134 = vector.load %arg8[%133, %c0_52] : memref<64x128xf32, #tpu.memory_space<vmem>>, vector<8x128xf32>
    %c0_53 = arith.constant 0 : index
    %c0_54 = arith.constant 0 : index
    %c0_55 = arith.constant 0 : index
    %135 = vector.load %arg4[%c0_53, %c0_54, %c0_55] : memref<1x32x128xf32, #tpu.memory_space<vmem>>, vector<1x32x128xf32>
    %136 = vector.shape_cast %135 : vector<1x32x128xf32> to vector<32x128xf32>
    %cst_56 = arith.constant dense<0.000000e+00> : vector<8x128xf32>
    %137 = tpu.matmul %119, %136, %cst_56 {dimension_numbers = #tpu.dot_dimension_numbers<[1], [0], [0], [1], [0, 0, 1, 1], [], []>} : vector<8x32xf32>, vector<32x128xf32>, vector<8x128xf32> -> vector<8x128xf32>
    %138 = arith.addf %134, %137 : vector<8x128xf32>
    %139 = vector.extract_strided_slice %138 {offsets = [0, 0], sizes = [8, 64], strides = [1, 1]} : vector<8x128xf32> to vector<8x64xf32>
    %140 = arith.negf %139 : vector<8x64xf32>
    %141 = math.exp %140 : vector<8x64xf32>
    %cst_57 = arith.constant 1.000000e+00 : f32
    %142 = vector.broadcast %cst_57 : f32 to vector<8x64xf32>
    %143 = arith.addf %142, %141 : vector<8x64xf32>
    %144 = arith.divf %142, %143 : vector<8x64xf32>
    %145 = vector.extract_strided_slice %138 {offsets = [0, 64], sizes = [8, 32], strides = [1, 1]} : vector<8x128xf32> to vector<8x32xf32>
    %146 = math.tanh %145 : vector<8x32xf32>
    %147 = vector.extract_strided_slice %138 {offsets = [0, 96], sizes = [8, 32], strides = [1, 1]} : vector<8x128xf32> to vector<8x32xf32>
    %148 = arith.negf %147 : vector<8x32xf32>
    %149 = math.exp %148 : vector<8x32xf32>
    %cst_58 = arith.constant 1.000000e+00 : f32
    %150 = vector.broadcast %cst_58 : f32 to vector<8x32xf32>
    %151 = arith.addf %150, %149 : vector<8x32xf32>
    %152 = arith.divf %150, %151 : vector<8x32xf32>
    %153 = vector.extract_strided_slice %144 {offsets = [0, 32], sizes = [8, 32], strides = [1, 1]} : vector<8x64xf32> to vector<8x32xf32>
    %154 = arith.mulf %153, %117 : vector<8x32xf32>
    %155 = vector.extract_strided_slice %144 {offsets = [0, 0], sizes = [8, 32], strides = [1, 1]} : vector<8x64xf32> to vector<8x32xf32>
    %156 = arith.mulf %155, %146 : vector<8x32xf32>
    %157 = arith.addf %154, %156 : vector<8x32xf32>
    %158 = math.tanh %157 : vector<8x32xf32>
    %159 = arith.mulf %152, %158 : vector<8x32xf32>
    %c7_i32_59 = arith.constant 7 : i32
    %160 = arith.muli %arg0, %c7_i32_59 : i32
    %c2_i32_60 = arith.constant 2 : i32
    %161 = arith.muli %c2_i32_60, %arg0 : i32
    %c1_i32_61 = arith.constant 1 : i32
    %162 = arith.subi %c1_i32_61, %161 : i32
    %163 = arith.muli %162, %c3_i32 : i32
    %164 = arith.addi %160, %163 : i32
    %c8_i32_62 = arith.constant 8 : i32
    %165 = arith.muli %164, %c8_i32_62 : i32
    %166 = tpu.assume_multiple %165, 8 : i32
    %c0_63 = arith.constant 0 : index
    %167 = arith.index_cast %166 : i32 to index
    %c0_64 = arith.constant 0 : index
    %168 = vector.load %arg5[%c0_63, %167, %c0_64] : memref<1x64x32xf32, #tpu.memory_space<vmem>>, vector<1x8x32xf32>
    %169 = vector.shape_cast %168 : vector<1x8x32xf32> to vector<8x32xf32>
    %170 = vector.shape_cast %159 : vector<8x32xf32> to vector<1x8x32xf32>
    tpu.vector_store %arg5[%c0_63, %167, %c0_64], %170 {strides = array<i32>} : memref<1x64x32xf32, #tpu.memory_space<vmem>>, vector<1x8x32xf32>,
    %c4_i32 = arith.constant 4 : i32
    %c8_i32_65 = arith.constant 8 : i32
    %171 = arith.muli %c4_i32, %c8_i32_65 : i32
    %172 = tpu.assume_multiple %171, 8 : i32
    %173 = arith.index_cast %172 : i32 to index
    %c0_66 = arith.constant 0 : index
    %174 = vector.load %arg8[%173, %c0_66] : memref<64x128xf32, #tpu.memory_space<vmem>>, vector<8x128xf32>
    %c0_67 = arith.constant 0 : index
    %c0_68 = arith.constant 0 : index
    %c0_69 = arith.constant 0 : index
    %175 = vector.load %arg4[%c0_67, %c0_68, %c0_69] : memref<1x32x128xf32, #tpu.memory_space<vmem>>, vector<1x32x128xf32>
    %176 = vector.shape_cast %175 : vector<1x32x128xf32> to vector<32x128xf32>
    %cst_70 = arith.constant dense<0.000000e+00> : vector<8x128xf32>
    %177 = tpu.matmul %159, %176, %cst_70 {dimension_numbers = #tpu.dot_dimension_numbers<[1], [0], [0], [1], [0, 0, 1, 1], [], []>} : vector<8x32xf32>, vector<32x128xf32>, vector<8x128xf32> -> vector<8x128xf32>
    %178 = arith.addf %174, %177 : vector<8x128xf32>
    %179 = vector.extract_strided_slice %178 {offsets = [0, 0], sizes = [8, 64], strides = [1, 1]} : vector<8x128xf32> to vector<8x64xf32>
    %180 = arith.negf %179 : vector<8x64xf32>
    %181 = math.exp %180 : vector<8x64xf32>
    %cst_71 = arith.constant 1.000000e+00 : f32
    %182 = vector.broadcast %cst_71 : f32 to vector<8x64xf32>
    %183 = arith.addf %182, %181 : vector<8x64xf32>
    %184 = arith.divf %182, %183 : vector<8x64xf32>
    %185 = vector.extract_strided_slice %178 {offsets = [0, 64], sizes = [8, 32], strides = [1, 1]} : vector<8x128xf32> to vector<8x32xf32>
    %186 = math.tanh %185 : vector<8x32xf32>
    %187 = vector.extract_strided_slice %178 {offsets = [0, 96], sizes = [8, 32], strides = [1, 1]} : vector<8x128xf32> to vector<8x32xf32>
    %188 = arith.negf %187 : vector<8x32xf32>
    %189 = math.exp %188 : vector<8x32xf32>
    %cst_72 = arith.constant 1.000000e+00 : f32
    %190 = vector.broadcast %cst_72 : f32 to vector<8x32xf32>
    %191 = arith.addf %190, %189 : vector<8x32xf32>
    %192 = arith.divf %190, %191 : vector<8x32xf32>
    %193 = vector.extract_strided_slice %184 {offsets = [0, 32], sizes = [8, 32], strides = [1, 1]} : vector<8x64xf32> to vector<8x32xf32>
    %194 = arith.mulf %193, %157 : vector<8x32xf32>
    %195 = vector.extract_strided_slice %184 {offsets = [0, 0], sizes = [8, 32], strides = [1, 1]} : vector<8x64xf32> to vector<8x32xf32>
    %196 = arith.mulf %195, %186 : vector<8x32xf32>
    %197 = arith.addf %194, %196 : vector<8x32xf32>
    %198 = math.tanh %197 : vector<8x32xf32>
    %199 = arith.mulf %192, %198 : vector<8x32xf32>
    %c7_i32_73 = arith.constant 7 : i32
    %200 = arith.muli %arg0, %c7_i32_73 : i32
    %c2_i32_74 = arith.constant 2 : i32
    %201 = arith.muli %c2_i32_74, %arg0 : i32
    %c1_i32_75 = arith.constant 1 : i32
    %202 = arith.subi %c1_i32_75, %201 : i32
    %203 = arith.muli %202, %c4_i32 : i32
    %204 = arith.addi %200, %203 : i32
    %c8_i32_76 = arith.constant 8 : i32
    %205 = arith.muli %204, %c8_i32_76 : i32
    %206 = tpu.assume_multiple %205, 8 : i32
    %c0_77 = arith.constant 0 : index
    %207 = arith.index_cast %206 : i32 to index
    %c0_78 = arith.constant 0 : index
    %208 = vector.load %arg5[%c0_77, %207, %c0_78] : memref<1x64x32xf32, #tpu.memory_space<vmem>>, vector<1x8x32xf32>
    %209 = vector.shape_cast %208 : vector<1x8x32xf32> to vector<8x32xf32>
    %210 = vector.shape_cast %199 : vector<8x32xf32> to vector<1x8x32xf32>
    tpu.vector_store %arg5[%c0_77, %207, %c0_78], %210 {strides = array<i32>} : memref<1x64x32xf32, #tpu.memory_space<vmem>>, vector<1x8x32xf32>,
    %c5_i32 = arith.constant 5 : i32
    %c8_i32_79 = arith.constant 8 : i32
    %211 = arith.muli %c5_i32, %c8_i32_79 : i32
    %212 = tpu.assume_multiple %211, 8 : i32
    %213 = arith.index_cast %212 : i32 to index
    %c0_80 = arith.constant 0 : index
    %214 = vector.load %arg8[%213, %c0_80] : memref<64x128xf32, #tpu.memory_space<vmem>>, vector<8x128xf32>
    %c0_81 = arith.constant 0 : index
    %c0_82 = arith.constant 0 : index
    %c0_83 = arith.constant 0 : index
    %215 = vector.load %arg4[%c0_81, %c0_82, %c0_83] : memref<1x32x128xf32, #tpu.memory_space<vmem>>, vector<1x32x128xf32>
    %216 = vector.shape_cast %215 : vector<1x32x128xf32> to vector<32x128xf32>
    %cst_84 = arith.constant dense<0.000000e+00> : vector<8x128xf32>
    %217 = tpu.matmul %199, %216, %cst_84 {dimension_numbers = #tpu.dot_dimension_numbers<[1], [0], [0], [1], [0, 0, 1, 1], [], []>} : vector<8x32xf32>, vector<32x128xf32>, vector<8x128xf32> -> vector<8x128xf32>
    %218 = arith.addf %214, %217 : vector<8x128xf32>
    %219 = vector.extract_strided_slice %218 {offsets = [0, 0], sizes = [8, 64], strides = [1, 1]} : vector<8x128xf32> to vector<8x64xf32>
    %220 = arith.negf %219 : vector<8x64xf32>
    %221 = math.exp %220 : vector<8x64xf32>
    %cst_85 = arith.constant 1.000000e+00 : f32
    %222 = vector.broadcast %cst_85 : f32 to vector<8x64xf32>
    %223 = arith.addf %222, %221 : vector<8x64xf32>
    %224 = arith.divf %222, %223 : vector<8x64xf32>
    %225 = vector.extract_strided_slice %218 {offsets = [0, 64], sizes = [8, 32], strides = [1, 1]} : vector<8x128xf32> to vector<8x32xf32>
    %226 = math.tanh %225 : vector<8x32xf32>
    %227 = vector.extract_strided_slice %218 {offsets = [0, 96], sizes = [8, 32], strides = [1, 1]} : vector<8x128xf32> to vector<8x32xf32>
    %228 = arith.negf %227 : vector<8x32xf32>
    %229 = math.exp %228 : vector<8x32xf32>
    %cst_86 = arith.constant 1.000000e+00 : f32
    %230 = vector.broadcast %cst_86 : f32 to vector<8x32xf32>
    %231 = arith.addf %230, %229 : vector<8x32xf32>
    %232 = arith.divf %230, %231 : vector<8x32xf32>
    %233 = vector.extract_strided_slice %224 {offsets = [0, 32], sizes = [8, 32], strides = [1, 1]} : vector<8x64xf32> to vector<8x32xf32>
    %234 = arith.mulf %233, %197 : vector<8x32xf32>
    %235 = vector.extract_strided_slice %224 {offsets = [0, 0], sizes = [8, 32], strides = [1, 1]} : vector<8x64xf32> to vector<8x32xf32>
    %236 = arith.mulf %235, %226 : vector<8x32xf32>
    %237 = arith.addf %234, %236 : vector<8x32xf32>
    %238 = math.tanh %237 : vector<8x32xf32>
    %239 = arith.mulf %232, %238 : vector<8x32xf32>
    %c7_i32_87 = arith.constant 7 : i32
    %240 = arith.muli %arg0, %c7_i32_87 : i32
    %c2_i32_88 = arith.constant 2 : i32
    %241 = arith.muli %c2_i32_88, %arg0 : i32
    %c1_i32_89 = arith.constant 1 : i32
    %242 = arith.subi %c1_i32_89, %241 : i32
    %243 = arith.muli %242, %c5_i32 : i32
    %244 = arith.addi %240, %243 : i32
    %c8_i32_90 = arith.constant 8 : i32
    %245 = arith.muli %244, %c8_i32_90 : i32
    %246 = tpu.assume_multiple %245, 8 : i32
    %c0_91 = arith.constant 0 : index
    %247 = arith.index_cast %246 : i32 to index
    %c0_92 = arith.constant 0 : index
    %248 = vector.load %arg5[%c0_91, %247, %c0_92] : memref<1x64x32xf32, #tpu.memory_space<vmem>>, vector<1x8x32xf32>
    %249 = vector.shape_cast %248 : vector<1x8x32xf32> to vector<8x32xf32>
    %250 = vector.shape_cast %239 : vector<8x32xf32> to vector<1x8x32xf32>
    tpu.vector_store %arg5[%c0_91, %247, %c0_92], %250 {strides = array<i32>} : memref<1x64x32xf32, #tpu.memory_space<vmem>>, vector<1x8x32xf32>,
    %c6_i32 = arith.constant 6 : i32
    %c8_i32_93 = arith.constant 8 : i32
    %251 = arith.muli %c6_i32, %c8_i32_93 : i32
    %252 = tpu.assume_multiple %251, 8 : i32
    %253 = arith.index_cast %252 : i32 to index
    %c0_94 = arith.constant 0 : index
    %254 = vector.load %arg8[%253, %c0_94] : memref<64x128xf32, #tpu.memory_space<vmem>>, vector<8x128xf32>
    %c0_95 = arith.constant 0 : index
    %c0_96 = arith.constant 0 : index
    %c0_97 = arith.constant 0 : index
    %255 = vector.load %arg4[%c0_95, %c0_96, %c0_97] : memref<1x32x128xf32, #tpu.memory_space<vmem>>, vector<1x32x128xf32>
    %256 = vector.shape_cast %255 : vector<1x32x128xf32> to vector<32x128xf32>
    %cst_98 = arith.constant dense<0.000000e+00> : vector<8x128xf32>
    %257 = tpu.matmul %239, %256, %cst_98 {dimension_numbers = #tpu.dot_dimension_numbers<[1], [0], [0], [1], [0, 0, 1, 1], [], []>} : vector<8x32xf32>, vector<32x128xf32>, vector<8x128xf32> -> vector<8x128xf32>
    %258 = arith.addf %254, %257 : vector<8x128xf32>
    %259 = vector.extract_strided_slice %258 {offsets = [0, 0], sizes = [8, 64], strides = [1, 1]} : vector<8x128xf32> to vector<8x64xf32>
    %260 = arith.negf %259 : vector<8x64xf32>
    %261 = math.exp %260 : vector<8x64xf32>
    %cst_99 = arith.constant 1.000000e+00 : f32
    %262 = vector.broadcast %cst_99 : f32 to vector<8x64xf32>
    %263 = arith.addf %262, %261 : vector<8x64xf32>
    %264 = arith.divf %262, %263 : vector<8x64xf32>
    %265 = vector.extract_strided_slice %258 {offsets = [0, 64], sizes = [8, 32], strides = [1, 1]} : vector<8x128xf32> to vector<8x32xf32>
    %266 = math.tanh %265 : vector<8x32xf32>
    %267 = vector.extract_strided_slice %258 {offsets = [0, 96], sizes = [8, 32], strides = [1, 1]} : vector<8x128xf32> to vector<8x32xf32>
    %268 = arith.negf %267 : vector<8x32xf32>
    %269 = math.exp %268 : vector<8x32xf32>
    %cst_100 = arith.constant 1.000000e+00 : f32
    %270 = vector.broadcast %cst_100 : f32 to vector<8x32xf32>
    %271 = arith.addf %270, %269 : vector<8x32xf32>
    %272 = arith.divf %270, %271 : vector<8x32xf32>
    %273 = vector.extract_strided_slice %264 {offsets = [0, 32], sizes = [8, 32], strides = [1, 1]} : vector<8x64xf32> to vector<8x32xf32>
    %274 = arith.mulf %273, %237 : vector<8x32xf32>
    %275 = vector.extract_strided_slice %264 {offsets = [0, 0], sizes = [8, 32], strides = [1, 1]} : vector<8x64xf32> to vector<8x32xf32>
    %276 = arith.mulf %275, %266 : vector<8x32xf32>
    %277 = arith.addf %274, %276 : vector<8x32xf32>
    %278 = math.tanh %277 : vector<8x32xf32>
    %279 = arith.mulf %272, %278 : vector<8x32xf32>
    %c7_i32_101 = arith.constant 7 : i32
    %280 = arith.muli %arg0, %c7_i32_101 : i32
    %c2_i32_102 = arith.constant 2 : i32
    %281 = arith.muli %c2_i32_102, %arg0 : i32
    %c1_i32_103 = arith.constant 1 : i32
    %282 = arith.subi %c1_i32_103, %281 : i32
    %283 = arith.muli %282, %c6_i32 : i32
    %284 = arith.addi %280, %283 : i32
    %c8_i32_104 = arith.constant 8 : i32
    %285 = arith.muli %284, %c8_i32_104 : i32
    %286 = tpu.assume_multiple %285, 8 : i32
    %c0_105 = arith.constant 0 : index
    %287 = arith.index_cast %286 : i32 to index
    %c0_106 = arith.constant 0 : index
    %288 = vector.load %arg5[%c0_105, %287, %c0_106] : memref<1x64x32xf32, #tpu.memory_space<vmem>>, vector<1x8x32xf32>
    %289 = vector.shape_cast %288 : vector<1x8x32xf32> to vector<8x32xf32>
    %290 = vector.shape_cast %279 : vector<8x32xf32> to vector<1x8x32xf32>
    tpu.vector_store %arg5[%c0_105, %287, %c0_106], %290 {strides = array<i32>} : memref<1x64x32xf32, #tpu.memory_space<vmem>>, vector<1x8x32xf32>,
    %c7_i32_107 = arith.constant 7 : i32
    %c8_i32_108 = arith.constant 8 : i32
    %291 = arith.muli %c7_i32_107, %c8_i32_108 : i32
    %292 = tpu.assume_multiple %291, 8 : i32
    %293 = arith.index_cast %292 : i32 to index
    %c0_109 = arith.constant 0 : index
    %294 = vector.load %arg8[%293, %c0_109] : memref<64x128xf32, #tpu.memory_space<vmem>>, vector<8x128xf32>
    %c0_110 = arith.constant 0 : index
    %c0_111 = arith.constant 0 : index
    %c0_112 = arith.constant 0 : index
    %295 = vector.load %arg4[%c0_110, %c0_111, %c0_112] : memref<1x32x128xf32, #tpu.memory_space<vmem>>, vector<1x32x128xf32>
    %296 = vector.shape_cast %295 : vector<1x32x128xf32> to vector<32x128xf32>
    %cst_113 = arith.constant dense<0.000000e+00> : vector<8x128xf32>
    %297 = tpu.matmul %279, %296, %cst_113 {dimension_numbers = #tpu.dot_dimension_numbers<[1], [0], [0], [1], [0, 0, 1, 1], [], []>} : vector<8x32xf32>, vector<32x128xf32>, vector<8x128xf32> -> vector<8x128xf32>
    %298 = arith.addf %294, %297 : vector<8x128xf32>
    %299 = vector.extract_strided_slice %298 {offsets = [0, 0], sizes = [8, 64], strides = [1, 1]} : vector<8x128xf32> to vector<8x64xf32>
    %300 = arith.negf %299 : vector<8x64xf32>
    %301 = math.exp %300 : vector<8x64xf32>
    %cst_114 = arith.constant 1.000000e+00 : f32
    %302 = vector.broadcast %cst_114 : f32 to vector<8x64xf32>
    %303 = arith.addf %302, %301 : vector<8x64xf32>
    %304 = arith.divf %302, %303 : vector<8x64xf32>
    %305 = vector.extract_strided_slice %298 {offsets = [0, 64], sizes = [8, 32], strides = [1, 1]} : vector<8x128xf32> to vector<8x32xf32>
    %306 = math.tanh %305 : vector<8x32xf32>
    %307 = vector.extract_strided_slice %298 {offsets = [0, 96], sizes = [8, 32], strides = [1, 1]} : vector<8x128xf32> to vector<8x32xf32>
    %308 = arith.negf %307 : vector<8x32xf32>
    %309 = math.exp %308 : vector<8x32xf32>
    %cst_115 = arith.constant 1.000000e+00 : f32
    %310 = vector.broadcast %cst_115 : f32 to vector<8x32xf32>
    %311 = arith.addf %310, %309 : vector<8x32xf32>
    %312 = arith.divf %310, %311 : vector<8x32xf32>
    %313 = vector.extract_strided_slice %304 {offsets = [0, 32], sizes = [8, 32], strides = [1, 1]} : vector<8x64xf32> to vector<8x32xf32>
    %314 = arith.mulf %313, %277 : vector<8x32xf32>
    %315 = vector.extract_strided_slice %304 {offsets = [0, 0], sizes = [8, 32], strides = [1, 1]} : vector<8x64xf32> to vector<8x32xf32>
    %316 = arith.mulf %315, %306 : vector<8x32xf32>
    %317 = arith.addf %314, %316 : vector<8x32xf32>
    %318 = math.tanh %317 : vector<8x32xf32>
    %319 = arith.mulf %312, %318 : vector<8x32xf32>
    %c7_i32_116 = arith.constant 7 : i32
    %320 = arith.muli %arg0, %c7_i32_116 : i32
    %c2_i32_117 = arith.constant 2 : i32
    %321 = arith.muli %c2_i32_117, %arg0 : i32
    %c1_i32_118 = arith.constant 1 : i32
    %322 = arith.subi %c1_i32_118, %321 : i32
    %323 = arith.muli %322, %c7_i32_107 : i32
    %324 = arith.addi %320, %323 : i32
    %c8_i32_119 = arith.constant 8 : i32
    %325 = arith.muli %324, %c8_i32_119 : i32
    %326 = tpu.assume_multiple %325, 8 : i32
    %c0_120 = arith.constant 0 : index
    %327 = arith.index_cast %326 : i32 to index
    %c0_121 = arith.constant 0 : index
    %328 = vector.load %arg5[%c0_120, %327, %c0_121] : memref<1x64x32xf32, #tpu.memory_space<vmem>>, vector<1x8x32xf32>
    %329 = vector.shape_cast %328 : vector<1x8x32xf32> to vector<8x32xf32>
    %330 = vector.shape_cast %319 : vector<8x32xf32> to vector<1x8x32xf32>
    tpu.vector_store %arg5[%c0_120, %327, %c0_121], %330 {strides = array<i32>} : memref<1x64x32xf32, #tpu.memory_space<vmem>>, vector<1x8x32xf32>,
    %c8_i32_122 = arith.constant 8 : i32
    %c0_123 = arith.constant 0 : index
    %c0_124 = arith.constant 0 : index
    %c0_125 = arith.constant 0 : index
    %331 = vector.load %arg6[%c0_123, %c0_124, %c0_125] : memref<1x8x32xf32, #tpu.memory_space<vmem>>, vector<1x8x32xf32>
    %332 = vector.shape_cast %331 : vector<1x8x32xf32> to vector<8x32xf32>
    %333 = vector.shape_cast %319 : vector<8x32xf32> to vector<1x8x32xf32>
    tpu.vector_store %arg6[%c0_123, %c0_124, %c0_125], %333 {strides = array<i32>} : memref<1x8x32xf32, #tpu.memory_space<vmem>>, vector<1x8x32xf32>,
    %c0_126 = arith.constant 0 : index
    %c0_127 = arith.constant 0 : index
    %c0_128 = arith.constant 0 : index
    %334 = vector.load %arg7[%c0_126, %c0_127, %c0_128] : memref<1x8x32xf32, #tpu.memory_space<vmem>>, vector<1x8x32xf32>
    %335 = vector.shape_cast %334 : vector<1x8x32xf32> to vector<8x32xf32>
    %336 = vector.shape_cast %317 : vector<8x32xf32> to vector<1x8x32xf32>
    tpu.vector_store %arg7[%c0_126, %c0_127, %c0_128], %336 {strides = array<i32>} : memref<1x8x32xf32, #tpu.memory_space<vmem>>, vector<1x8x32xf32>,
    return
  }
  func.func @transform_0(%arg0: i32) -> (i32, i32, i32) {
    %c0_i32 = arith.constant 0 : i32
    %c0_i32_0 = arith.constant 0 : i32
    %c0_i32_1 = arith.constant 0 : i32
    return %arg0, %c0_i32, %c0_i32_0 : i32, i32, i32
  }
  func.func @transform_1(%arg0: i32) -> (i32, i32, i32) {
    %c0_i32 = arith.constant 0 : i32
    %c0_i32_0 = arith.constant 0 : i32
    %c0_i32_1 = arith.constant 0 : i32
    return %arg0, %c0_i32, %c0_i32_0 : i32, i32, i32
  }
  func.func @transform_2(%arg0: i32) -> (i32, i32, i32) {
    %c0_i32 = arith.constant 0 : i32
    %c0_i32_0 = arith.constant 0 : i32
    %c0_i32_1 = arith.constant 0 : i32
    return %arg0, %c0_i32, %c0_i32_0 : i32, i32, i32
  }
  func.func @transform_3(%arg0: i32) -> (i32, i32, i32) {
    %c0_i32 = arith.constant 0 : i32
    %c0_i32_0 = arith.constant 0 : i32
    %c0_i32_1 = arith.constant 0 : i32
    return %arg0, %c0_i32, %c0_i32_0 : i32, i32, i32
  }
  func.func @transform_4(%arg0: i32) -> (i32, i32, i32) {
    %c0_i32 = arith.constant 0 : i32
    %c0_i32_0 = arith.constant 0 : i32
    %c0_i32_1 = arith.constant 0 : i32
    return %arg0, %c0_i32, %c0_i32_0 : i32, i32, i32
  }
  func.func @transform_5(%arg0: i32) -> (i32, i32, i32) {
    %c0_i32 = arith.constant 0 : i32
    %c0_i32_0 = arith.constant 0 : i32
    %c0_i32_1 = arith.constant 0 : i32
    return %arg0, %c0_i32, %c0_i32_0 : i32, i32, i32
  }
  func.func @transform_6(%arg0: i32) -> (i32, i32, i32) {
    %c0_i32 = arith.constant 0 : i32
    %c0_i32_0 = arith.constant 0 : i32
    %c0_i32_1 = arith.constant 0 : i32
    return %arg0, %c0_i32, %c0_i32_0 : i32, i32, i32
  }
}

</mosaic_0001>

<llo_original>
// kernel: encoder_forward.1
$region0: #{encoder_forward.1}
  #allocation0 [shape = 'u32[]', space=smem, size = 0x4, offset = 0x4, fixed_abs, tag = 'smem constant byte address 0x4 - core index']
  #allocation1 [shape = 'u32[144,128]{1,0:T(1,128)}', space=vmem, size = 0x12000, scoped, tag = 'internal scratch']
  #allocation2 [shape = 'f32[64,128]{1,0:T(8,128)}', space=vmem, size = 0x8000, scoped, tag = 'scratch operand']
  %s0 = inlined_call_operand.vmem [shape: f32[2,64,32], index: 0, kind: input, shape index: {}]
  %s1 = inlined_call_operand.vmem [shape: f32[2,32,128], index: 1, kind: input, shape index: {}]
  %s2 = inlined_call_operand.vmem [shape: f32[2,1,128], index: 2, kind: input, shape index: {}]
  %s3 = inlined_call_operand.vmem [shape: f32[2,32,128], index: 3, kind: input, shape index: {}]
  %s4 = inlined_call_operand.vmem [shape: f32[2,64,32], index: 4, kind: output, shape index: {0}]
  %s5 = inlined_call_operand.vmem [shape: f32[2,8,32], index: 5, kind: output, shape index: {1}]
  %s6 = inlined_call_operand.vmem [shape: f32[2,8,32], index: 6, kind: output, shape index: {2}]
  %7 = xla_tuple %s4, %s5, %s6
  %s8 = sld [smem:[#allocation0]]
  $region65: #{encoder_forward.1} parent=0
    _
  %s10 = ssub.s32 1, %s8
  %s11 = scalar_select 0, %s10, %s8
  loop: start=0, step=1, limit=4
  $region2: #{encoder_forward.1} parent=0 // loop_pre_header
    _
  $region3: #{encoder_forward.1} parent=0 // loop_header
    %s13 = sphi 0, %s17
    %p14 = scmp.ge.s32.totalorder %s13, 4
    %s23 = sphi 0, %s25
    %s26 = sphi 0, %s23
    %s27 = sphi 0, %s26
    %s43 = sphi 0, %s27
    %s49 = sphi 0, %s51
    %s52 = sphi 0, %s49
    %s53 = sphi 0, %s52
    %s69 = sphi 0, %s53
    %s75 = sphi 0, %s77
    %s78 = sphi 0, %s75
    %s79 = sphi 0, %s78
    %s95 = sphi 0, %s79
    %s101 = sphi 0, %s103
    %s104 = sphi 0, %s101
    %s105 = sphi 0, %s104
    %s121 = sphi 0, %s105
    %s127 = sphi 0, %s129
    %s130 = sphi 0, %s127
    %s131 = sphi 0, %s130
    %s147 = sphi 0, %s131
    %s153 = sphi 0, %s155
    %s156 = sphi 0, %s153
    %s157 = sphi 0, %s156
    %s173 = sphi 0, %s157
    %s179 = sphi 0, %s181
    %s182 = sphi 0, %s179
    %s183 = sphi 0, %s182
    %s199 = sphi 0, %s183
  $region4: #{encoder_forward.1} parent=0 // loop_header_branch
    %16 = sbr.rel (%p14) target = $region8
  $region5: #{encoder_forward.1} parent=0 // loop_body
    %s18 = ssub.s32 %s13, 1
    %s19 = ssub.s32 %s13, 2
    %s20 = sadd.s32 %s13, 1
    %s21 = ssub.s32 %s13, %s20
    %p22 = scmp.eq.s32.totalorder %s21, 0
    %s24 = sadd.s32 %s23, 1
    %s25 = scalar_select %p22, %s23, %s24
    %p28 = pneg %p22
    %p29 = scmp.eq.s32.totalorder %s13, 1
    %p30 = por %p28, %p29
    %p31 = scmp.ne.s32.totalorder %s23, %s26
    %p32 = scmp.eq.s32.totalorder %s13, 0
    %p33 = por %p31, %p32
    %p34 = scmp.ne.s32.totalorder %s23, %s26
    %p35 = scmp.eq.s32.totalorder %s18, 1
    %p36 = por %p34, %p35
    %p37 = scmp.ne.s32.totalorder %s26, %s27
    %p38 = scmp.eq.s32.totalorder %s18, 0
    %p39 = por %p37, %p38
    %p40 = scmp.ne.s32.totalorder %s26, %s27
    %p41 = scmp.eq.s32.totalorder %s19, 1
    %p42 = por %p40, %p41
    %p44 = scmp.ne.s32.totalorder %s27, %s43
    %p45 = scmp.eq.s32.totalorder %s19, 0
    %p46 = por %p44, %p45
    %s47 = ssub.s32 %s13, %s20
    %p48 = scmp.eq.s32.totalorder %s47, 0
    %s50 = sadd.s32 %s49, 1
    %s51 = scalar_select %p48, %s49, %s50
    %p54 = pneg %p48
    %p55 = scmp.eq.s32.totalorder %s13, 1
    %p56 = por %p54, %p55
    %p57 = scmp.ne.s32.totalorder %s49, %s52
    %p58 = scmp.eq.s32.totalorder %s13, 0
    %p59 = por %p57, %p58
    %p60 = scmp.ne.s32.totalorder %s49, %s52
    %p61 = scmp.eq.s32.totalorder %s18, 1
    %p62 = por %p60, %p61
    %p63 = scmp.ne.s32.totalorder %s52, %s53
    %p64 = scmp.eq.s32.totalorder %s18, 0
    %p65 = por %p63, %p64
    %p66 = scmp.ne.s32.totalorder %s52, %s53
    %p67 = scmp.eq.s32.totalorder %s19, 1
    %p68 = por %p66, %p67
    %p70 = scmp.ne.s32.totalorder %s53, %s69
    %p71 = scmp.eq.s32.totalorder %s19, 0
    %p72 = por %p70, %p71
    %s73 = ssub.s32 %s13, %s20
    %p74 = scmp.eq.s32.totalorder %s73, 0
    %s76 = sadd.s32 %s75, 1
    %s77 = scalar_select %p74, %s75, %s76
    %p80 = pneg %p74
    %p81 = scmp.eq.s32.totalorder %s13, 1
    %p82 = por %p80, %p81
    %p83 = scmp.ne.s32.totalorder %s75, %s78
    %p84 = scmp.eq.s32.totalorder %s13, 0
    %p85 = por %p83, %p84
    %p86 = scmp.ne.s32.totalorder %s75, %s78
    %p87 = scmp.eq.s32.totalorder %s18, 1
    %p88 = por %p86, %p87
    %p89 = scmp.ne.s32.totalorder %s78, %s79
    %p90 = scmp.eq.s32.totalorder %s18, 0
    %p91 = por %p89, %p90
    %p92 = scmp.ne.s32.totalorder %s78, %s79
    %p93 = scmp.eq.s32.totalorder %s19, 1
    %p94 = por %p92, %p93
    %p96 = scmp.ne.s32.totalorder %s79, %s95
    %p97 = scmp.eq.s32.totalorder %s19, 0
    %p98 = por %p96, %p97
    %s99 = ssub.s32 %s13, %s20
    %p100 = scmp.eq.s32.totalorder %s99, 0
    %s102 = sadd.s32 %s101, 1
    %s103 = scalar_select %p100, %s101, %s102
    %p106 = pneg %p100
    %p107 = scmp.eq.s32.totalorder %s13, 1
    %p108 = por %p106, %p107
    %p109 = scmp.ne.s32.totalorder %s101, %s104
    %p110 = scmp.eq.s32.totalorder %s13, 0
    %p111 = por %p109, %p110
    %p112 = scmp.ne.s32.totalorder %s101, %s104
    %p113 = scmp.eq.s32.totalorder %s18, 1
    %p114 = por %p112, %p113
    %p115 = scmp.ne.s32.totalorder %s104, %s105
    %p116 = scmp.eq.s32.totalorder %s18, 0
    %p117 = por %p115, %p116
    %p118 = scmp.ne.s32.totalorder %s104, %s105
    %p119 = scmp.eq.s32.totalorder %s19, 1
    %p120 = por %p118, %p119
    %p122 = scmp.ne.s32.totalorder %s105, %s121
    %p123 = scmp.eq.s32.totalorder %s19, 0
    %p124 = por %p122, %p123
    %s125 = ssub.s32 %s13, %s20
    %p126 = scmp.eq.s32.totalorder %s125, 0
    %s128 = sadd.s32 %s127, 1
    %s129 = scalar_select %p126, %s127, %s128
    %p132 = pneg %p126
    %p133 = scmp.eq.s32.totalorder %s13, 1
    %p134 = por %p132, %p133
    %p135 = scmp.ne.s32.totalorder %s127, %s130
    %p136 = scmp.eq.s32.totalorder %s13, 0
    %p137 = por %p135, %p136
    %p138 = scmp.ne.s32.totalorder %s127, %s130
    %p139 = scmp.eq.s32.totalorder %s18, 1
    %p140 = por %p138, %p139
    %p141 = scmp.ne.s32.totalorder %s130, %s131
    %p142 = scmp.eq.s32.totalorder %s18, 0
    %p143 = por %p141, %p142
    %p144 = scmp.ne.s32.totalorder %s130, %s131
    %p145 = scmp.eq.s32.totalorder %s19, 1
    %p146 = por %p144, %p145
    %p148 = scmp.ne.s32.totalorder %s131, %s147
    %p149 = scmp.eq.s32.totalorder %s19, 0
    %p150 = por %p148, %p149
    %s151 = ssub.s32 %s13, %s20
    %p152 = scmp.eq.s32.totalorder %s151, 0
    %s154 = sadd.s32 %s153, 1
    %s155 = scalar_select %p152, %s153, %s154
    %p158 = pneg %p152
    %p159 = scmp.eq.s32.totalorder %s13, 1
    %p160 = por %p158, %p159
    %p161 = scmp.ne.s32.totalorder %s153, %s156
    %p162 = scmp.eq.s32.totalorder %s13, 0
    %p163 = por %p161, %p162
    %p164 = scmp.ne.s32.totalorder %s153, %s156
    %p165 = scmp.eq.s32.totalorder %s18, 1
    %p166 = por %p164, %p165
    %p167 = scmp.ne.s32.totalorder %s156, %s157
    %p168 = scmp.eq.s32.totalorder %s18, 0
    %p169 = por %p167, %p168
    %p170 = scmp.ne.s32.totalorder %s156, %s157
    %p171 = scmp.eq.s32.totalorder %s19, 1
    %p172 = por %p170, %p171
    %p174 = scmp.ne.s32.totalorder %s157, %s173
    %p175 = scmp.eq.s32.totalorder %s19, 0
    %p176 = por %p174, %p175
    %s177 = ssub.s32 %s13, %s20
    %p178 = scmp.eq.s32.totalorder %s177, 0
    %s180 = sadd.s32 %s179, 1
    %s181 = scalar_select %p178, %s179, %s180
    %p184 = pneg %p178
    %p185 = scmp.eq.s32.totalorder %s13, 1
    %p186 = por %p184, %p185
    %p187 = scmp.ne.s32.totalorder %s179, %s182
    %p188 = scmp.eq.s32.totalorder %s13, 0
    %p189 = por %p187, %p188
    %p190 = scmp.ne.s32.totalorder %s179, %s182
    %p191 = scmp.eq.s32.totalorder %s18, 1
    %p192 = por %p190, %p191
    %p193 = scmp.ne.s32.totalorder %s182, %s183
    %p194 = scmp.eq.s32.totalorder %s18, 0
    %p195 = por %p193, %p194
    %p196 = scmp.ne.s32.totalorder %s182, %s183
    %p197 = scmp.eq.s32.totalorder %s19, 1
    %p198 = por %p196, %p197
    %p200 = scmp.ne.s32.totalorder %s183, %s199
    %p201 = scmp.eq.s32.totalorder %s19, 0
    %p202 = por %p200, %p201
    %p203 = scmp.le.s32.totalorder 1, %s13
    %p204 = scmp.lt.s32.totalorder %s13, 3
    %p205 = pnand %p203, %p204
    %p206 = pneg %p205
    // Predicated region
    $region9: #{encoder_forward.1} parent=5 // pred_check
      _
    $region10: #{encoder_forward.1} parent=5 // pred_check_branch
      %208 = sbr.rel (%p205) target = $region12
    $region11: #{encoder_forward.1} parent=5 // pred_region
      %s209 = ssub.s32 %s13, 1
    $region12: #{encoder_forward.1} parent=5 // pred_fallthru
      _
    %p210 = scmp.lt.s32.totalorder %s13, 2
    // Predicated region
    $region13: #{encoder_forward.1} parent=5 // pred_check
      %p211 = pneg %p210
    $region14: #{encoder_forward.1} parent=5 // pred_check_branch
      %213 = sbr.rel (%p211) target = $region16
    $region15: #{encoder_forward.1} parent=5 // pred_region
      // Predicated region
      $region17: #{encoder_forward.1} parent=15 // pred_check
        %p214 = pneg %p33
      $region18: #{encoder_forward.1} parent=15 // pred_check_branch
        %216 = sbr.rel (%p214) target = $region20
      $region19: #{encoder_forward.1} parent=15 // pred_region
        %p217 = scmp.lt.s32.totalorder %s13, 1
        %s218 = scalar_select %p217, %s13, 1
        %s219 = smul.addr %s218, 8
        %s220 = smul.addr %s219, 8
        %s221 = scalar_lea.vmem %s0, %s220
      $region20: #{encoder_forward.1} parent=15 // pred_fallthru
        _
      // Predicated region
      $region21: #{encoder_forward.1} parent=15 // pred_check
        %p222 = pneg %p59
      $region22: #{encoder_forward.1} parent=15 // pred_check_branch
        %224 = sbr.rel (%p222) target = $region24
      $region23: #{encoder_forward.1} parent=15 // pred_region
        %p225 = scmp.lt.s32.totalorder %s13, 1
        %s226 = scalar_select %p225, %s13, 1
        %s227 = smul.addr %s226, 4
        %s228 = smul.addr %s227, 8
        %s229 = scalar_lea.vmem %s1, %s228
      $region24: #{encoder_forward.1} parent=15 // pred_fallthru
        _
      // Predicated region
      $region25: #{encoder_forward.1} parent=15 // pred_check
        %p230 = pneg %p85
      $region26: #{encoder_forward.1} parent=15 // pred_check_branch
        %232 = sbr.rel (%p230) target = $region28
      $region27: #{encoder_forward.1} parent=15 // pred_region
        %p233 = scmp.lt.s32.totalorder %s13, 1
        %s234 = scalar_select %p233, %s13, 1
        %s235 = scalar_lea.vmem %s2, %s234
      $region28: #{encoder_forward.1} parent=15 // pred_fallthru
        _
      // Predicated region
      $region29: #{encoder_forward.1} parent=15 // pred_check
        %p236 = pneg %p111
      $region30: #{encoder_forward.1} parent=15 // pred_check_branch
        %238 = sbr.rel (%p236) target = $region32
      $region31: #{encoder_forward.1} parent=15 // pred_region
        %p239 = scmp.lt.s32.totalorder %s13, 1
        %s240 = scalar_select %p239, %s13, 1
        %s241 = smul.addr %s240, 4
        %s242 = smul.addr %s241, 8
        %s243 = scalar_lea.vmem %s3, %s242
      $region32: #{encoder_forward.1} parent=15 // pred_fallthru
        _
    $region16: #{encoder_forward.1} parent=5 // pred_fallthru
      _
    %p244 = scmp.le.s32.totalorder 1, %s13
    %p245 = scmp.lt.s32.totalorder %s13, 3
    %p246 = pnand %p244, %p245
    %p247 = pneg %p246
    // Predicated region
    $region33: #{encoder_forward.1} parent=5 // pred_check
      _
    $region34: #{encoder_forward.1} parent=5 // pred_check_branch
      %249 = sbr.rel (%p246) target = $region36
    $region35: #{encoder_forward.1} parent=5 // pred_region
      %s250 = ssub.s32 %s13, 1
      %p251 = scmp.lt.s32.totalorder %s18, 1
      %s252 = scalar_select %p251, %s18, 1
      %s253 = smul.addr %s252, 8
      %s254 = smul.addr %s253, 8
      %s255 = scalar_lea.vmem %s0, %s254
      %p256 = pneg %p39
      %p257 = pneg %p36
      %p258 = scmp.lt.s32.totalorder %s18, 1
      %s259 = scalar_select %p258, %s18, 1
      %s260 = smul.addr %s259, 4
      %s261 = smul.addr %s260, 8
      %s262 = scalar_lea.vmem %s1, %s261
      %p263 = pneg %p65
      %p264 = pneg %p62
      %p265 = scmp.lt.s32.totalorder %s18, 1
      %s266 = scalar_select %p265, %s18, 1
      %s267 = scalar_lea.vmem %s2, %s266
      %p268 = pneg %p91
      %p269 = pneg %p88
      %p270 = scmp.lt.s32.totalorder %s18, 1
      %s271 = scalar_select %p270, %s18, 1
      %s272 = smul.addr %s271, 4
      %s273 = smul.addr %s272, 8
      %s274 = scalar_lea.vmem %s3, %s273
      %p275 = pneg %p117
      %p276 = pneg %p114
      %p277 = pneg %p143
      %p278 = pneg %p140
      %p279 = scmp.lt.s32.totalorder %s18, 1
      %s280 = scalar_select %p279, %s18, 1
      %s281 = smul.addr %s280, 8
      %s282 = smul.addr %s281, 8
      %s283 = scalar_lea.vmem %s4, %s282
      %p284 = pneg %p169
      %p285 = pneg %p166
      %p286 = scmp.lt.s32.totalorder %s18, 1
      %s287 = scalar_select %p286, %s18, 1
      %s288 = smul.addr %s287, 8
      %s289 = scalar_lea.vmem %s5, %s288
      %p290 = pneg %p195
      %p291 = pneg %p192
      %p292 = scmp.lt.s32.totalorder %s18, 1
      %s293 = scalar_select %p292, %s18, 1
      %s294 = smul.addr %s293, 8
      %s295 = scalar_lea.vmem %s6, %s294
      %p296 = scmp.lt.s32.totalorder %s18, 1
      %s297 = scalar_select %p296, %s18, 1
      %s298 = smul.addr %s297, 8
      %s299 = smul.addr %s298, 8
      %s300 = scalar_lea.vmem %s0, %s299
      %p301 = scmp.lt.s32.totalorder %s18, 1
      %s302 = scalar_select %p301, %s18, 1
      %s303 = smul.addr %s302, 4
      %s304 = smul.addr %s303, 8
      %s305 = scalar_lea.vmem %s1, %s304
      %p306 = scmp.lt.s32.totalorder %s18, 1
      %s307 = scalar_select %p306, %s18, 1
      %s308 = scalar_lea.vmem %s2, %s307
      %p309 = scmp.lt.s32.totalorder %s18, 1
      %s310 = scalar_select %p309, %s18, 1
      %s311 = smul.addr %s310, 4
      %s312 = smul.addr %s311, 8
      %s313 = scalar_lea.vmem %s3, %s312
      %p314 = scmp.lt.s32.totalorder %s18, 1
      %s315 = scalar_select %p314, %s18, 1
      %s316 = smul.addr %s315, 8
      %s317 = smul.addr %s316, 8
      %s318 = scalar_lea.vmem %s4, %s317
      %p319 = scmp.lt.s32.totalorder %s18, 1
      %s320 = scalar_select %p319, %s18, 1
      %s321 = smul.addr %s320, 8
      %s322 = scalar_lea.vmem %s5, %s321
      %p323 = scmp.lt.s32.totalorder %s18, 1
      %s324 = scalar_select %p323, %s18, 1
      %s325 = smul.addr %s324, 8
      %s326 = scalar_lea.vmem %s6, %s325
      %v327 = vld [vmem:[%s300] sm:$0xff]
      %v328 = vld [vmem:[%s300 + $0x8] sm:$0xff]
      %v329 = vld [vmem:[%s300 + $0x10] sm:$0xff]
      %v330 = vld [vmem:[%s300 + $0x18] sm:$0xff]
      %v331 = vld [vmem:[%s300 + $0x20] sm:$0xff]
      %v332 = vld [vmem:[%s300 + $0x28] sm:$0xff]
      %v333 = vld [vmem:[%s300 + $0x30] sm:$0xff]
      %v334 = vld [vmem:[%s300 + $0x38] sm:$0xff]
      %v335 = vld [vmem:[%s305] sm:$0xff]
      %v336 = vld [vmem:[%s305 + $0x8] sm:$0xff]
      %v337 = vld [vmem:[%s305 + $0x10] sm:$0xff]
      %v338 = vld [vmem:[%s305 + $0x18] sm:$0xff]
      %v339 = vld [vmem:[%s308] sm:$0x1]
      %v341 = vlaneseq
      %v342 = vshrl.u32 %v341, 7
      %v343 = vsub.s32 0, %v342
      %v344 = vrot.slane %v339, %v343
      %vm346 = vcmask 261120
      %v348 = vsel %vm346, %v327, 0
      %v351 = vsel %vm346, %v328, 0
      %v354 = vsel %vm346, %v329, 0
      %v357 = vsel %vm346, %v330, 0
      %v360 = vsel %vm346, %v331, 0
      %v363 = vsel %vm346, %v332, 0
      %v366 = vsel %vm346, %v333, 0
      %v369 = vsel %vm346, %v334, 0
      %371 = vmatprep.subr.mxu0 0.0
      %372 = vmatpush1.msra.mxu0 0.0
      %373 = vmatprep.subr.mxu0 0.0
      %374 = vmatpush1.msra.mxu0 0.0
      %375 = vmatprep.subr.mxu0 0.0
      %376 = vmatpush1.msra.mxu0 0.0
      %377 = vmatprep.subr.mxu0 0.0
      %378 = vmatpush1.msra.mxu0 0.0
      %379 = vmatprep.subr.mxu0 0.0
      %380 = vmatpush1.msra.mxu0 0.0
      %381 = vmatprep.subr.mxu0 0.0
      %382 = vmatpush1.msra.mxu0 0.0
      %383 = vmatprep.subr.mxu0 0.0
      %384 = vmatpush1.msra.mxu0 0.0
      %385 = vmatprep.subr.mxu0 0.0
      %386 = vmatpush1.msra.mxu0 0.0
      %387 = vmatprep.subr.mxu0 0.0
      %388 = vmatpush1.msra.mxu0 0.0
      %389 = vmatprep.subr.mxu0 0.0
      %390 = vmatpush1.msra.mxu0 0.0
      %391 = vmatprep.subr.mxu0 0.0
      %392 = vmatpush1.msra.mxu0 0.0
      %393 = vmatprep.subr.mxu0 0.0
      %394 = vmatpush1.msra.mxu0 0.0
      %395 = vmatprep.subr.mxu0 0.0
      %396 = vmatpush1.msra.mxu0 %v338
      %397 = vmatprep.subr.mxu0 0.0
      %398 = vmatpush1.msra.mxu0 %v337
      %399 = vmatprep.subr.mxu0 0.0
      %400 = vmatpush1.msra.mxu0 %v336
      %401 = vmatprep.subr.mxu0 0.0
      %402 = vmatpush1.msra.mxu0 %v335
      %403 = vmatprep.subr.mxu0 0.0
      %404 = vmatpush2.msra.mxu0 0.0
      %405 = vmatprep.subr.mxu0 0.0
      %406 = vmatpush2.msra.mxu0 0.0
      %407 = vmatprep.subr.mxu0 0.0
      %408 = vmatpush2.msra.mxu0 0.0
      %409 = vmatprep.subr.mxu0 0.0
      %410 = vmatpush2.msra.mxu0 0.0
      %411 = vmatprep.subr.mxu0 0.0
      %412 = vmatpush2.msra.mxu0 0.0
      %413 = vmatprep.subr.mxu0 0.0
      %414 = vmatpush2.msra.mxu0 0.0
      %415 = vmatprep.subr.mxu0 0.0
      %416 = vmatpush2.msra.mxu0 0.0
      %417 = vmatprep.subr.mxu0 0.0
      %418 = vmatpush2.msra.mxu0 0.0
      %419 = vmatprep.subr.mxu0 0.0
      %420 = vmatpush2.msra.mxu0 0.0
      %421 = vmatprep.subr.mxu0 0.0
      %422 = vmatpush2.msra.mxu0 0.0
      %423 = vmatprep.subr.mxu0 0.0
      %424 = vmatpush2.msra.mxu0 0.0
      %425 = vmatprep.subr.mxu0 0.0
      %426 = vmatpush2.msra.mxu0 0.0
      %427 = vmatprep.subr.mxu0 0.0
      %428 = vmatpush2.msra.mxu0 0.0
      %429 = vmatprep.subr.mxu0 0.0
      %430 = vmatpush2.msra.mxu0 0.0
      %431 = vmatprep.subr.mxu0 0.0
      %432 = vmatpush2.msra.mxu0 0.0
      %433 = vmatprep.subr.mxu0 0.0
      %434 = vmatpush2.msra.mxu0 0.0
      %435 = vmatprep.mubr.f32.mxu0 0.0
      %436 = vmatmul.mubr.f32.gmra.mxu0 %v348
      %v437 = vpop.f32.mrf.mxu0
      %v438 = vadd.f32 %v344, %v437
      %v439 = vpop.f32.mrf.mxu0
      %440 = vmatprep.mubr.f32.mxu0 0.0
      %441 = vmatmul.mubr.f32.gmra.mxu0 %v351
      %v442 = vpop.f32.mrf.mxu0
      %v443 = vadd.f32 %v344, %v442
      %v444 = vpop.f32.mrf.mxu0
      %445 = vmatprep.mubr.f32.mxu0 0.0
      %446 = vmatmul.mubr.f32.gmra.mxu0 %v354
      %v447 = vpop.f32.mrf.mxu0
      %v448 = vadd.f32 %v344, %v447
      %v449 = vpop.f32.mrf.mxu0
      %450 = vmatprep.mubr.f32.mxu0 0.0
      %451 = vmatmul.mubr.f32.gmra.mxu0 %v357
      %v452 = vpop.f32.mrf.mxu0
      %v453 = vadd.f32 %v344, %v452
      %v454 = vpop.f32.mrf.mxu0
      %455 = vmatprep.mubr.f32.mxu0 0.0
      %456 = vmatmul.mubr.f32.gmra.mxu0 %v360
      %v457 = vpop.f32.mrf.mxu0
      %v458 = vadd.f32 %v344, %v457
      %v459 = vpop.f32.mrf.mxu0
      %460 = vmatprep.mubr.f32.mxu0 0.0
      %461 = vmatmul.mubr.f32.gmra.mxu0 %v363
      %v462 = vpop.f32.mrf.mxu0
      %v463 = vadd.f32 %v344, %v462
      %v464 = vpop.f32.mrf.mxu0
      %465 = vmatprep.mubr.f32.mxu0 0.0
      %466 = vmatmul.mubr.f32.gmra.mxu0 %v366
      %v467 = vpop.f32.mrf.mxu0
      %v468 = vadd.f32 %v344, %v467
      %v469 = vpop.f32.mrf.mxu0
      %470 = vmatprep.mubr.f32.mxu0 0.0
      %471 = vmatmul.mubr.f32.gmra.mxu0 %v369
      %v472 = vpop.f32.mrf.mxu0
      %v473 = vadd.f32 %v344, %v472
      %v474 = vpop.f32.mrf.mxu0
      %475 = vdwg.mxu0
      %476 = vst [vmem:[#allocation2] sm:$0xff] %v438
      %477 = vst [vmem:[#allocation2 + $0x8] sm:$0xff] %v443
      %478 = vst [vmem:[#allocation2 + $0x10] sm:$0xff] %v448
      %479 = vst [vmem:[#allocation2 + $0x18] sm:$0xff] %v453
      %480 = vst [vmem:[#allocation2 + $0x20] sm:$0xff] %v458
      %481 = vst [vmem:[#allocation2 + $0x28] sm:$0xff] %v463
      %482 = vst [vmem:[#allocation2 + $0x30] sm:$0xff] %v468
      %483 = vst [vmem:[#allocation2 + $0x38] sm:$0xff] %v473
      %v484 = vld [vmem:[#allocation2] sm:$0xff]
      %v485 = vld [vmem:[%s313] sm:$0xff]
      %v486 = vld [vmem:[%s313 + $0x8] sm:$0xff]
      %v487 = vld [vmem:[%s313 + $0x10] sm:$0xff]
      %v488 = vld [vmem:[%s313 + $0x18] sm:$0xff]
      %v490 = vsel %vm346, 0.0, 0
      %492 = vmatprep.subr.mxu0 0.0
      %493 = vmatpush1.msra.mxu0 0.0
      %494 = vmatprep.subr.mxu0 0.0
      %495 = vmatpush1.msra.mxu0 0.0
      %496 = vmatprep.subr.mxu0 0.0
      %497 = vmatpush1.msra.mxu0 0.0
      %498 = vmatprep.subr.mxu0 0.0
      %499 = vmatpush1.msra.mxu0 0.0
      %500 = vmatprep.subr.mxu0 0.0
      %501 = vmatpush1.msra.mxu0 0.0
      %502 = vmatprep.subr.mxu0 0.0
      %503 = vmatpush1.msra.mxu0 0.0
      %504 = vmatprep.subr.mxu0 0.0
      %505 = vmatpush1.msra.mxu0 0.0
      %506 = vmatprep.subr.mxu0 0.0
      %507 = vmatpush1.msra.mxu0 0.0
      %508 = vmatprep.subr.mxu0 0.0
      %509 = vmatpush1.msra.mxu0 0.0
      %510 = vmatprep.subr.mxu0 0.0
      %511 = vmatpush1.msra.mxu0 0.0
      %512 = vmatprep.subr.mxu0 0.0
      %513 = vmatpush1.msra.mxu0 0.0
      %514 = vmatprep.subr.mxu0 0.0
      %515 = vmatpush1.msra.mxu0 0.0
      %516 = vmatprep.subr.mxu0 0.0
      %517 = vmatpush1.msra.mxu0 %v488
      %518 = vmatprep.subr.mxu0 0.0
      %519 = vmatpush1.msra.mxu0 %v487
      %520 = vmatprep.subr.mxu0 0.0
      %521 = vmatpush1.msra.mxu0 %v486
      %522 = vmatprep.subr.mxu0 0.0
      %523 = vmatpush1.msra.mxu0 %v485
      %524 = vmatprep.subr.mxu0 0.0
      %525 = vmatpush2.msra.mxu0 0.0
      %526 = vmatprep.subr.mxu0 0.0
      %527 = vmatpush2.msra.mxu0 0.0
      %528 = vmatprep.subr.mxu0 0.0
      %529 = vmatpush2.msra.mxu0 0.0
      %530 = vmatprep.subr.mxu0 0.0
      %531 = vmatpush2.msra.mxu0 0.0
      %532 = vmatprep.subr.mxu0 0.0
      %533 = vmatpush2.msra.mxu0 0.0
      %534 = vmatprep.subr.mxu0 0.0
      %535 = vmatpush2.msra.mxu0 0.0
      %536 = vmatprep.subr.mxu0 0.0
      %537 = vmatpush2.msra.mxu0 0.0
      %538 = vmatprep.subr.mxu0 0.0
      %539 = vmatpush2.msra.mxu0 0.0
      %540 = vmatprep.subr.mxu0 0.0
      %541 = vmatpush2.msra.mxu0 0.0
      %542 = vmatprep.subr.mxu0 0.0
      %543 = vmatpush2.msra.mxu0 0.0
      %544 = vmatprep.subr.mxu0 0.0
      %545 = vmatpush2.msra.mxu0 0.0
      %546 = vmatprep.subr.mxu0 0.0
      %547 = vmatpush2.msra.mxu0 0.0
      %548 = vmatprep.subr.mxu0 0.0
      %549 = vmatpush2.msra.mxu0 0.0
      %550 = vmatprep.subr.mxu0 0.0
      %551 = vmatpush2.msra.mxu0 0.0
      %552 = vmatprep.subr.mxu0 0.0
      %553 = vmatpush2.msra.mxu0 0.0
      %554 = vmatprep.subr.mxu0 0.0
      %555 = vmatpush2.msra.mxu0 0.0
      %556 = vmatprep.mubr.f32.mxu0 0.0
      %557 = vmatmul.mubr.f32.gmra.mxu0 %v490
      %v558 = vpop.f32.mrf.mxu0
      %v559 = vadd.f32 0.0, %v558
      %v560 = vpop.f32.mrf.mxu0
      %561 = vdwg.mxu0
      %v562 = vadd.f32 %v484, %v559
      %v563 = vxor.u32 %v562, 2147483648
      %v564 = vmul.f32 %v563, 1.442695
      %v565 = vpow.pop %v564
      %v566 = vadd.f32 %v565, 1.0
      %v567 = vrcp.pop %v566
      %v568 = vmul.f32 1.0, %v567
      %v569 = vtanh.pop %v562
      %v570 = vmul.f32 %v568, 0.0
      %572 = vrot.lane.b32.xlu0 %v569, 64
      %v573 = vpop.permute.xlu0 %572
      %v575 = vmul.f32 %v568, %v573
      %577 = vrot.lane.b32.xlu0 %v575, 32
      %v578 = vpop.permute.xlu0 %577
      %v580 = vadd.f32 %v570, %v578
      %v581 = vtanh.pop %v580
      %583 = vrot.lane.b32.xlu0 %v581, 64
      %v584 = vpop.permute.xlu0 %583
      %v586 = vmul.f32 %v568, %v584
      %s587 = smul.u32 %s18, 56
      %589 = vrot.lane.b32.xlu0 %v586, 32
      %v590 = vpop.permute.xlu0 %589
      %s592 = scalar_lea.vmem %s318, %s587
      %593 = vst.msk [vmem:[%s592] sm:$0xff] %vm346, %v590
      %s594 = scalar_lea.vmem [#allocation2], 8
      %v595 = vld [vmem:[%s594] sm:$0xff]
      %v596 = vld [vmem:[%s313] sm:$0xff]
      %v597 = vld [vmem:[%s313 + $0x8] sm:$0xff]
      %v598 = vld [vmem:[%s313 + $0x10] sm:$0xff]
      %v599 = vld [vmem:[%s313 + $0x18] sm:$0xff]
      %v600 = vsel %vm346, %v590, 0
      %602 = vmatprep.subr.mxu0 0.0
      %603 = vmatpush1.msra.mxu0 0.0
      %604 = vmatprep.subr.mxu0 0.0
      %605 = vmatpush1.msra.mxu0 0.0
      %606 = vmatprep.subr.mxu0 0.0
      %607 = vmatpush1.msra.mxu0 0.0
      %608 = vmatprep.subr.mxu0 0.0
      %609 = vmatpush1.msra.mxu0 0.0
      %610 = vmatprep.subr.mxu0 0.0
      %611 = vmatpush1.msra.mxu0 0.0
      %612 = vmatprep.subr.mxu0 0.0
      %613 = vmatpush1.msra.mxu0 0.0
      %614 = vmatprep.subr.mxu0 0.0
      %615 = vmatpush1.msra.mxu0 0.0
      %616 = vmatprep.subr.mxu0 0.0
      %617 = vmatpush1.msra.mxu0 0.0
      %618 = vmatprep.subr.mxu0 0.0
      %619 = vmatpush1.msra.mxu0 0.0
      %620 = vmatprep.subr.mxu0 0.0
      %621 = vmatpush1.msra.mxu0 0.0
      %622 = vmatprep.subr.mxu0 0.0
      %623 = vmatpush1.msra.mxu0 0.0
      %624 = vmatprep.subr.mxu0 0.0
      %625 = vmatpush1.msra.mxu0 0.0
      %626 = vmatprep.subr.mxu0 0.0
      %627 = vmatpush1.msra.mxu0 %v599
      %628 = vmatprep.subr.mxu0 0.0
      %629 = vmatpush1.msra.mxu0 %v598
      %630 = vmatprep.subr.mxu0 0.0
      %631 = vmatpush1.msra.mxu0 %v597
      %632 = vmatprep.subr.mxu0 0.0
      %633 = vmatpush1.msra.mxu0 %v596
      %634 = vmatprep.subr.mxu0 0.0
      %635 = vmatpush2.msra.mxu0 0.0
      %636 = vmatprep.subr.mxu0 0.0
      %637 = vmatpush2.msra.mxu0 0.0
      %638 = vmatprep.subr.mxu0 0.0
      %639 = vmatpush2.msra.mxu0 0.0
      %640 = vmatprep.subr.mxu0 0.0
      %641 = vmatpush2.msra.mxu0 0.0
      %642 = vmatprep.subr.mxu0 0.0
      %643 = vmatpush2.msra.mxu0 0.0
      %644 = vmatprep.subr.mxu0 0.0
      %645 = vmatpush2.msra.mxu0 0.0
      %646 = vmatprep.subr.mxu0 0.0
      %647 = vmatpush2.msra.mxu0 0.0
      %648 = vmatprep.subr.mxu0 0.0
      %649 = vmatpush2.msra.mxu0 0.0
      %650 = vmatprep.subr.mxu0 0.0
      %651 = vmatpush2.msra.mxu0 0.0
      %652 = vmatprep.subr.mxu0 0.0
      %653 = vmatpush2.msra.mxu0 0.0
      %654 = vmatprep.subr.mxu0 0.0
      %655 = vmatpush2.msra.mxu0 0.0
      %656 = vmatprep.subr.mxu0 0.0
      %657 = vmatpush2.msra.mxu0 0.0
      %658 = vmatprep.subr.mxu0 0.0
      %659 = vmatpush2.msra.mxu0 0.0
      %660 = vmatprep.subr.mxu0 0.0
      %661 = vmatpush2.msra.mxu0 0.0
      %662 = vmatprep.subr.mxu0 0.0
      %663 = vmatpush2.msra.mxu0 0.0
      %664 = vmatprep.subr.mxu0 0.0
      %665 = vmatpush2.msra.mxu0 0.0
      %666 = vmatprep.mubr.f32.mxu0 0.0
      %667 = vmatmul.mubr.f32.gmra.mxu0 %v600
      %v668 = vpop.f32.mrf.mxu0
      %v669 = vadd.f32 0.0, %v668
      %v670 = vpop.f32.mrf.mxu0
      %671 = vdwg.mxu0
      %v672 = vadd.f32 %v595, %v669
      %v673 = vxor.u32 %v672, 2147483648
      %v674 = vmul.f32 %v673, 1.442695
      %v675 = vpow.pop %v674
      %v676 = vadd.f32 %v675, 1.0
      %v677 = vrcp.pop %v676
      %v678 = vmul.f32 1.0, %v677
      %v679 = vtanh.pop %v672
      %v680 = vmul.f32 %v678, %v580
      %682 = vrot.lane.b32.xlu0 %v679, 64
      %v683 = vpop.permute.xlu0 %682
      %v685 = vmul.f32 %v678, %v683
      %687 = vrot.lane.b32.xlu0 %v685, 32
      %v688 = vpop.permute.xlu0 %687
      %v690 = vadd.f32 %v680, %v688
      %v691 = vtanh.pop %v690
      %693 = vrot.lane.b32.xlu0 %v691, 64
      %v694 = vpop.permute.xlu0 %693
      %v696 = vmul.f32 %v678, %v694
      %s697 = smul.u32 %s18, 7
      %s698 = smul.u32 %s18, 2
      %s699 = ssub.s32 1, %s698
      %s700 = sadd.s32 %s697, %s699
      %s701 = smul.u32 %s700, 8
      %703 = vrot.lane.b32.xlu0 %v696, 32
      %v704 = vpop.permute.xlu0 %703
      %s706 = scalar_lea.vmem %s318, %s701
      %707 = vst.msk [vmem:[%s706] sm:$0xff] %vm346, %v704
      %s708 = scalar_lea.vmem [#allocation2], 16
      %v709 = vld [vmem:[%s708] sm:$0xff]
      %v710 = vld [vmem:[%s313] sm:$0xff]
      %v711 = vld [vmem:[%s313 + $0x8] sm:$0xff]
      %v712 = vld [vmem:[%s313 + $0x10] sm:$0xff]
      %v713 = vld [vmem:[%s313 + $0x18] sm:$0xff]
      %v714 = vsel %vm346, %v704, 0
      %716 = vmatprep.subr.mxu0 0.0
      %717 = vmatpush1.msra.mxu0 0.0
      %718 = vmatprep.subr.mxu0 0.0
      %719 = vmatpush1.msra.mxu0 0.0
      %720 = vmatprep.subr.mxu0 0.0
      %721 = vmatpush1.msra.mxu0 0.0
      %722 = vmatprep.subr.mxu0 0.0
      %723 = vmatpush1.msra.mxu0 0.0
      %724 = vmatprep.subr.mxu0 0.0
      %725 = vmatpush1.msra.mxu0 0.0
      %726 = vmatprep.subr.mxu0 0.0
      %727 = vmatpush1.msra.mxu0 0.0
      %728 = vmatprep.subr.mxu0 0.0
      %729 = vmatpush1.msra.mxu0 0.0
      %730 = vmatprep.subr.mxu0 0.0
      %731 = vmatpush1.msra.mxu0 0.0
      %732 = vmatprep.subr.mxu0 0.0
      %733 = vmatpush1.msra.mxu0 0.0
      %734 = vmatprep.subr.mxu0 0.0
      %735 = vmatpush1.msra.mxu0 0.0
      %736 = vmatprep.subr.mxu0 0.0
      %737 = vmatpush1.msra.mxu0 0.0
      %738 = vmatprep.subr.mxu0 0.0
      %739 = vmatpush1.msra.mxu0 0.0
      %740 = vmatprep.subr.mxu0 0.0
      %741 = vmatpush1.msra.mxu0 %v713
      %742 = vmatprep.subr.mxu0 0.0
      %743 = vmatpush1.msra.mxu0 %v712
      %744 = vmatprep.subr.mxu0 0.0
      %745 = vmatpush1.msra.mxu0 %v711
      %746 = vmatprep.subr.mxu0 0.0
      %747 = vmatpush1.msra.mxu0 %v710
      %748 = vmatprep.subr.mxu0 0.0
      %749 = vmatpush2.msra.mxu0 0.0
      %750 = vmatprep.subr.mxu0 0.0
      %751 = vmatpush2.msra.mxu0 0.0
      %752 = vmatprep.subr.mxu0 0.0
      %753 = vmatpush2.msra.mxu0 0.0
      %754 = vmatprep.subr.mxu0 0.0
      %755 = vmatpush2.msra.mxu0 0.0
      %756 = vmatprep.subr.mxu0 0.0
      %757 = vmatpush2.msra.mxu0 0.0
      %758 = vmatprep.subr.mxu0 0.0
      %759 = vmatpush2.msra.mxu0 0.0
      %760 = vmatprep.subr.mxu0 0.0
      %761 = vmatpush2.msra.mxu0 0.0
      %762 = vmatprep.subr.mxu0 0.0
      %763 = vmatpush2.msra.mxu0 0.0
      %764 = vmatprep.subr.mxu0 0.0
      %765 = vmatpush2.msra.mxu0 0.0
      %766 = vmatprep.subr.mxu0 0.0
      %767 = vmatpush2.msra.mxu0 0.0
      %768 = vmatprep.subr.mxu0 0.0
      %769 = vmatpush2.msra.mxu0 0.0
      %770 = vmatprep.subr.mxu0 0.0
      %771 = vmatpush2.msra.mxu0 0.0
      %772 = vmatprep.subr.mxu0 0.0
      %773 = vmatpush2.msra.mxu0 0.0
      %774 = vmatprep.subr.mxu0 0.0
      %775 = vmatpush2.msra.mxu0 0.0
      %776 = vmatprep.subr.mxu0 0.0
      %777 = vmatpush2.msra.mxu0 0.0
      %778 = vmatprep.subr.mxu0 0.0
      %779 = vmatpush2.msra.mxu0 0.0
      %780 = vmatprep.mubr.f32.mxu0 0.0
      %781 = vmatmul.mubr.f32.gmra.mxu0 %v714
      %v782 = vpop.f32.mrf.mxu0
      %v783 = vadd.f32 0.0, %v782
      %v784 = vpop.f32.mrf.mxu0
      %785 = vdwg.mxu0
      %v786 = vadd.f32 %v709, %v783
      %v787 = vxor.u32 %v786, 2147483648
      %v788 = vmul.f32 %v787, 1.442695
      %v789 = vpow.pop %v788
      %v790 = vadd.f32 %v789, 1.0
      %v791 = vrcp.pop %v790
      %v792 = vmul.f32 1.0, %v791
      %v793 = vtanh.pop %v786
      %v794 = vmul.f32 %v792, %v690
      %796 = vrot.lane.b32.xlu0 %v793, 64
      %v797 = vpop.permute.xlu0 %796
      %v799 = vmul.f32 %v792, %v797
      %801 = vrot.lane.b32.xlu0 %v799, 32
      %v802 = vpop.permute.xlu0 %801
      %v804 = vadd.f32 %v794, %v802
      %v805 = vtanh.pop %v804
      %807 = vrot.lane.b32.xlu0 %v805, 64
      %v808 = vpop.permute.xlu0 %807
      %v810 = vmul.f32 %v792, %v808
      %s811 = smul.u32 %s699, 2
      %s812 = sadd.s32 %s697, %s811
      %s813 = smul.u32 %s812, 8
      %815 = vrot.lane.b32.xlu0 %v810, 32
      %v816 = vpop.permute.xlu0 %815
      %s818 = scalar_lea.vmem %s318, %s813
      %819 = vst.msk [vmem:[%s818] sm:$0xff] %vm346, %v816
      %s820 = scalar_lea.vmem [#allocation2], 24
      %v821 = vld [vmem:[%s820] sm:$0xff]
      %v822 = vld [vmem:[%s313] sm:$0xff]
      %v823 = vld [vmem:[%s313 + $0x8] sm:$0xff]
      %v824 = vld [vmem:[%s313 + $0x10] sm:$0xff]
      %v825 = vld [vmem:[%s313 + $0x18] sm:$0xff]
      %v826 = vsel %vm346, %v816, 0
      %828 = vmatprep.subr.mxu0 0.0
      %829 = vmatpush1.msra.mxu0 0.0
      %830 = vmatprep.subr.mxu0 0.0
      %831 = vmatpush1.msra.mxu0 0.0
      %832 = vmatprep.subr.mxu0 0.0
      %833 = vmatpush1.msra.mxu0 0.0
      %834 = vmatprep.subr.mxu0 0.0
      %835 = vmatpush1.msra.mxu0 0.0
      %836 = vmatprep.subr.mxu0 0.0
      %837 = vmatpush1.msra.mxu0 0.0
      %838 = vmatprep.subr.mxu0 0.0
      %839 = vmatpush1.msra.mxu0 0.0
      %840 = vmatprep.subr.mxu0 0.0
      %841 = vmatpush1.msra.mxu0 0.0
      %842 = vmatprep.subr.mxu0 0.0
      %843 = vmatpush1.msra.mxu0 0.0
      %844 = vmatprep.subr.mxu0 0.0
      %845 = vmatpush1.msra.mxu0 0.0
      %846 = vmatprep.subr.mxu0 0.0
      %847 = vmatpush1.msra.mxu0 0.0
      %848 = vmatprep.subr.mxu0 0.0
      %849 = vmatpush1.msra.mxu0 0.0
      %850 = vmatprep.subr.mxu0 0.0
      %851 = vmatpush1.msra.mxu0 0.0
      %852 = vmatprep.subr.mxu0 0.0
      %853 = vmatpush1.msra.mxu0 %v825
      %854 = vmatprep.subr.mxu0 0.0
      %855 = vmatpush1.msra.mxu0 %v824
      %856 = vmatprep.subr.mxu0 0.0
      %857 = vmatpush1.msra.mxu0 %v823
      %858 = vmatprep.subr.mxu0 0.0
      %859 = vmatpush1.msra.mxu0 %v822
      %860 = vmatprep.subr.mxu0 0.0
      %861 = vmatpush2.msra.mxu0 0.0
      %862 = vmatprep.subr.mxu0 0.0
      %863 = vmatpush2.msra.mxu0 0.0
      %864 = vmatprep.subr.mxu0 0.0
      %865 = vmatpush2.msra.mxu0 0.0
      %866 = vmatprep.subr.mxu0 0.0
      %867 = vmatpush2.msra.mxu0 0.0
      %868 = vmatprep.subr.mxu0 0.0
      %869 = vmatpush2.msra.mxu0 0.0
      %870 = vmatprep.subr.mxu0 0.0
      %871 = vmatpush2.msra.mxu0 0.0
      %872 = vmatprep.subr.mxu0 0.0
      %873 = vmatpush2.msra.mxu0 0.0
      %874 = vmatprep.subr.mxu0 0.0
      %875 = vmatpush2.msra.mxu0 0.0
      %876 = vmatprep.subr.mxu0 0.0
      %877 = vmatpush2.msra.mxu0 0.0
      %878 = vmatprep.subr.mxu0 0.0
      %879 = vmatpush2.msra.mxu0 0.0
      %880 = vmatprep.subr.mxu0 0.0
      %881 = vmatpush2.msra.mxu0 0.0
      %882 = vmatprep.subr.mxu0 0.0
      %883 = vmatpush2.msra.mxu0 0.0
      %884 = vmatprep.subr.mxu0 0.0
      %885 = vmatpush2.msra.mxu0 0.0
      %886 = vmatprep.subr.mxu0 0.0
      %887 = vmatpush2.msra.mxu0 0.0
      %888 = vmatprep.subr.mxu0 0.0
      %889 = vmatpush2.msra.mxu0 0.0
      %890 = vmatprep.subr.mxu0 0.0
      %891 = vmatpush2.msra.mxu0 0.0
      %892 = vmatprep.mubr.f32.mxu0 0.0
      %893 = vmatmul.mubr.f32.gmra.mxu0 %v826
      %v894 = vpop.f32.mrf.mxu0
      %v895 = vadd.f32 0.0, %v894
      %v896 = vpop.f32.mrf.mxu0
      %897 = vdwg.mxu0
      %v898 = vadd.f32 %v821, %v895
      %v899 = vxor.u32 %v898, 2147483648
      %v900 = vmul.f32 %v899, 1.442695
      %v901 = vpow.pop %v900
      %v902 = vadd.f32 %v901, 1.0
      %v903 = vrcp.pop %v902
      %v904 = vmul.f32 1.0, %v903
      %v905 = vtanh.pop %v898
      %v906 = vmul.f32 %v904, %v804
      %908 = vrot.lane.b32.xlu0 %v905, 64
      %v909 = vpop.permute.xlu0 %908
      %v911 = vmul.f32 %v904, %v909
      %913 = vrot.lane.b32.xlu0 %v911, 32
      %v914 = vpop.permute.xlu0 %913
      %v916 = vadd.f32 %v906, %v914
      %v917 = vtanh.pop %v916
      %919 = vrot.lane.b32.xlu0 %v917, 64
      %v920 = vpop.permute.xlu0 %919
      %v922 = vmul.f32 %v904, %v920
      %s923 = smul.u32 %s699, 3
      %s924 = sadd.s32 %s697, %s923
      %s925 = smul.u32 %s924, 8
      %927 = vrot.lane.b32.xlu0 %v922, 32
      %v928 = vpop.permute.xlu0 %927
      %s930 = scalar_lea.vmem %s318, %s925
      %931 = vst.msk [vmem:[%s930] sm:$0xff] %vm346, %v928
      %s932 = scalar_lea.vmem [#allocation2], 32
      %v933 = vld [vmem:[%s932] sm:$0xff]
      %v934 = vld [vmem:[%s313] sm:$0xff]
      %v935 = vld [vmem:[%s313 + $0x8] sm:$0xff]
      %v936 = vld [vmem:[%s313 + $0x10] sm:$0xff]
      %v937 = vld [vmem:[%s313 + $0x18] sm:$0xff]
      %v938 = vsel %vm346, %v928, 0
      %940 = vmatprep.subr.mxu0 0.0
      %941 = vmatpush1.msra.mxu0 0.0
      %942 = vmatprep.subr.mxu0 0.0
      %943 = vmatpush1.msra.mxu0 0.0
      %944 = vmatprep.subr.mxu0 0.0
      %945 = vmatpush1.msra.mxu0 0.0
      %946 = vmatprep.subr.mxu0 0.0
      %947 = vmatpush1.msra.mxu0 0.0
      %948 = vmatprep.subr.mxu0 0.0
      %949 = vmatpush1.msra.mxu0 0.0
      %950 = vmatprep.subr.mxu0 0.0
      %951 = vmatpush1.msra.mxu0 0.0
      %952 = vmatprep.subr.mxu0 0.0
      %953 = vmatpush1.msra.mxu0 0.0
      %954 = vmatprep.subr.mxu0 0.0
      %955 = vmatpush1.msra.mxu0 0.0
      %956 = vmatprep.subr.mxu0 0.0
      %957 = vmatpush1.msra.mxu0 0.0
      %958 = vmatprep.subr.mxu0 0.0
      %959 = vmatpush1.msra.mxu0 0.0
      %960 = vmatprep.subr.mxu0 0.0
      %961 = vmatpush1.msra.mxu0 0.0
      %962 = vmatprep.subr.mxu0 0.0
      %963 = vmatpush1.msra.mxu0 0.0
      %964 = vmatprep.subr.mxu0 0.0
      %965 = vmatpush1.msra.mxu0 %v937
      %966 = vmatprep.subr.mxu0 0.0
      %967 = vmatpush1.msra.mxu0 %v936
      %968 = vmatprep.subr.mxu0 0.0
      %969 = vmatpush1.msra.mxu0 %v935
      %970 = vmatprep.subr.mxu0 0.0
      %971 = vmatpush1.msra.mxu0 %v934
      %972 = vmatprep.subr.mxu0 0.0
      %973 = vmatpush2.msra.mxu0 0.0
      %974 = vmatprep.subr.mxu0 0.0
      %975 = vmatpush2.msra.mxu0 0.0
      %976 = vmatprep.subr.mxu0 0.0
      %977 = vmatpush2.msra.mxu0 0.0
      %978 = vmatprep.subr.mxu0 0.0
      %979 = vmatpush2.msra.mxu0 0.0
      %980 = vmatprep.subr.mxu0 0.0
      %981 = vmatpush2.msra.mxu0 0.0
      %982 = vmatprep.subr.mxu0 0.0
      %983 = vmatpush2.msra.mxu0 0.0
      %984 = vmatprep.subr.mxu0 0.0
      %985 = vmatpush2.msra.mxu0 0.0
      %986 = vmatprep.subr.mxu0 0.0
      %987 = vmatpush2.msra.mxu0 0.0
      %988 = vmatprep.subr.mxu0 0.0
      %989 = vmatpush2.msra.mxu0 0.0
      %990 = vmatprep.subr.mxu0 0.0
      %991 = vmatpush2.msra.mxu0 0.0
      %992 = vmatprep.subr.mxu0 0.0
      %993 = vmatpush2.msra.mxu0 0.0
      %994 = vmatprep.subr.mxu0 0.0
      %995 = vmatpush2.msra.mxu0 0.0
      %996 = vmatprep.subr.mxu0 0.0
      %997 = vmatpush2.msra.mxu0 0.0
      %998 = vmatprep.subr.mxu0 0.0
      %999 = vmatpush2.msra.mxu0 0.0
      %1000 = vmatprep.subr.mxu0 0.0
      %1001 = vmatpush2.msra.mxu0 0.0
      %1002 = vmatprep.subr.mxu0 0.0
      %1003 = vmatpush2.msra.mxu0 0.0
      %1004 = vmatprep.mubr.f32.mxu0 0.0
      %1005 = vmatmul.mubr.f32.gmra.mxu0 %v938
      %v1006 = vpop.f32.mrf.mxu0
      %v1007 = vadd.f32 0.0, %v1006
      %v1008 = vpop.f32.mrf.mxu0
      %1009 = vdwg.mxu0
      %v1010 = vadd.f32 %v933, %v1007
      %v1011 = vxor.u32 %v1010, 2147483648
      %v1012 = vmul.f32 %v1011, 1.442695
      %v1013 = vpow.pop %v1012
      %v1014 = vadd.f32 %v1013, 1.0
      %v1015 = vrcp.pop %v1014
      %v1016 = vmul.f32 1.0, %v1015
      %v1017 = vtanh.pop %v1010
      %v1018 = vmul.f32 %v1016, %v916
      %1020 = vrot.lane.b32.xlu0 %v1017, 64
      %v1021 = vpop.permute.xlu0 %1020
      %v1023 = vmul.f32 %v1016, %v1021
      %1025 = vrot.lane.b32.xlu0 %v1023, 32
      %v1026 = vpop.permute.xlu0 %1025
      %v1028 = vadd.f32 %v1018, %v1026
      %v1029 = vtanh.pop %v1028
      %1031 = vrot.lane.b32.xlu0 %v1029, 64
      %v1032 = vpop.permute.xlu0 %1031
      %v1034 = vmul.f32 %v1016, %v1032
      %s1035 = smul.u32 %s699, 4
      %s1036 = sadd.s32 %s697, %s1035
      %s1037 = smul.u32 %s1036, 8
      %1039 = vrot.lane.b32.xlu0 %v1034, 32
      %v1040 = vpop.permute.xlu0 %1039
      %s1042 = scalar_lea.vmem %s318, %s1037
      %1043 = vst.msk [vmem:[%s1042] sm:$0xff] %vm346, %v1040
      %s1044 = scalar_lea.vmem [#allocation2], 40
      %v1045 = vld [vmem:[%s1044] sm:$0xff]
      %v1046 = vld [vmem:[%s313] sm:$0xff]
      %v1047 = vld [vmem:[%s313 + $0x8] sm:$0xff]
      %v1048 = vld [vmem:[%s313 + $0x10] sm:$0xff]
      %v1049 = vld [vmem:[%s313 + $0x18] sm:$0xff]
      %v1050 = vsel %vm346, %v1040, 0
      %1052 = vmatprep.subr.mxu0 0.0
      %1053 = vmatpush1.msra.mxu0 0.0
      %1054 = vmatprep.subr.mxu0 0.0
      %1055 = vmatpush1.msra.mxu0 0.0
      %1056 = vmatprep.subr.mxu0 0.0
      %1057 = vmatpush1.msra.mxu0 0.0
      %1058 = vmatprep.subr.mxu0 0.0
      %1059 = vmatpush1.msra.mxu0 0.0
      %1060 = vmatprep.subr.mxu0 0.0
      %1061 = vmatpush1.msra.mxu0 0.0
      %1062 = vmatprep.subr.mxu0 0.0
      %1063 = vmatpush1.msra.mxu0 0.0
      %1064 = vmatprep.subr.mxu0 0.0
      %1065 = vmatpush1.msra.mxu0 0.0
      %1066 = vmatprep.subr.mxu0 0.0
      %1067 = vmatpush1.msra.mxu0 0.0
      %1068 = vmatprep.subr.mxu0 0.0
      %1069 = vmatpush1.msra.mxu0 0.0
      %1070 = vmatprep.subr.mxu0 0.0
      %1071 = vmatpush1.msra.mxu0 0.0
      %1072 = vmatprep.subr.mxu0 0.0
      %1073 = vmatpush1.msra.mxu0 0.0
      %1074 = vmatprep.subr.mxu0 0.0
      %1075 = vmatpush1.msra.mxu0 0.0
      %1076 = vmatprep.subr.mxu0 0.0
      %1077 = vmatpush1.msra.mxu0 %v1049
      %1078 = vmatprep.subr.mxu0 0.0
      %1079 = vmatpush1.msra.mxu0 %v1048
      %1080 = vmatprep.subr.mxu0 0.0
      %1081 = vmatpush1.msra.mxu0 %v1047
      %1082 = vmatprep.subr.mxu0 0.0
      %1083 = vmatpush1.msra.mxu0 %v1046
      %1084 = vmatprep.subr.mxu0 0.0
      %1085 = vmatpush2.msra.mxu0 0.0
      %1086 = vmatprep.subr.mxu0 0.0
      %1087 = vmatpush2.msra.mxu0 0.0
      %1088 = vmatprep.subr.mxu0 0.0
      %1089 = vmatpush2.msra.mxu0 0.0
      %1090 = vmatprep.subr.mxu0 0.0
      %1091 = vmatpush2.msra.mxu0 0.0
      %1092 = vmatprep.subr.mxu0 0.0
      %1093 = vmatpush2.msra.mxu0 0.0
      %1094 = vmatprep.subr.mxu0 0.0
      %1095 = vmatpush2.msra.mxu0 0.0
      %1096 = vmatprep.subr.mxu0 0.0
      %1097 = vmatpush2.msra.mxu0 0.0
      %1098 = vmatprep.subr.mxu0 0.0
      %1099 = vmatpush2.msra.mxu0 0.0
      %1100 = vmatprep.subr.mxu0 0.0
      %1101 = vmatpush2.msra.mxu0 0.0
      %1102 = vmatprep.subr.mxu0 0.0
      %1103 = vmatpush2.msra.mxu0 0.0
      %1104 = vmatprep.subr.mxu0 0.0
      %1105 = vmatpush2.msra.mxu0 0.0
      %1106 = vmatprep.subr.mxu0 0.0
      %1107 = vmatpush2.msra.mxu0 0.0
      %1108 = vmatprep.subr.mxu0 0.0
      %1109 = vmatpush2.msra.mxu0 0.0
      %1110 = vmatprep.subr.mxu0 0.0
      %1111 = vmatpush2.msra.mxu0 0.0
      %1112 = vmatprep.subr.mxu0 0.0
      %1113 = vmatpush2.msra.mxu0 0.0
      %1114 = vmatprep.subr.mxu0 0.0
      %1115 = vmatpush2.msra.mxu0 0.0
      %1116 = vmatprep.mubr.f32.mxu0 0.0
      %1117 = vmatmul.mubr.f32.gmra.mxu0 %v1050
      %v1118 = vpop.f32.mrf.mxu0
      %v1119 = vadd.f32 0.0, %v1118
      %v1120 = vpop.f32.mrf.mxu0
      %1121 = vdwg.mxu0
      %v1122 = vadd.f32 %v1045, %v1119
      %v1123 = vxor.u32 %v1122, 2147483648
      %v1124 = vmul.f32 %v1123, 1.442695
      %v1125 = vpow.pop %v1124
      %v1126 = vadd.f32 %v1125, 1.0
      %v1127 = vrcp.pop %v1126
      %v1128 = vmul.f32 1.0, %v1127
      %v1129 = vtanh.pop %v1122
      %v1130 = vmul.f32 %v1128, %v1028
      %1132 = vrot.lane.b32.xlu0 %v1129, 64
      %v1133 = vpop.permute.xlu0 %1132
      %v1135 = vmul.f32 %v1128, %v1133
      %1137 = vrot.lane.b32.xlu0 %v1135, 32
      %v1138 = vpop.permute.xlu0 %1137
      %v1140 = vadd.f32 %v1130, %v1138
      %v1141 = vtanh.pop %v1140
      %1143 = vrot.lane.b32.xlu0 %v1141, 64
      %v1144 = vpop.permute.xlu0 %1143
      %v1146 = vmul.f32 %v1128, %v1144
      %s1147 = smul.u32 %s699, 5
      %s1148 = sadd.s32 %s697, %s1147
      %s1149 = smul.u32 %s1148, 8
      %1151 = vrot.lane.b32.xlu0 %v1146, 32
      %v1152 = vpop.permute.xlu0 %1151
      %s1154 = scalar_lea.vmem %s318, %s1149
      %1155 = vst.msk [vmem:[%s1154] sm:$0xff] %vm346, %v1152
      %s1156 = scalar_lea.vmem [#allocation2], 48
      %v1157 = vld [vmem:[%s1156] sm:$0xff]
      %v1158 = vld [vmem:[%s313] sm:$0xff]
      %v1159 = vld [vmem:[%s313 + $0x8] sm:$0xff]
      %v1160 = vld [vmem:[%s313 + $0x10] sm:$0xff]
      %v1161 = vld [vmem:[%s313 + $0x18] sm:$0xff]
      %v1162 = vsel %vm346, %v1152, 0
      %1164 = vmatprep.subr.mxu0 0.0
      %1165 = vmatpush1.msra.mxu0 0.0
      %1166 = vmatprep.subr.mxu0 0.0
      %1167 = vmatpush1.msra.mxu0 0.0
      %1168 = vmatprep.subr.mxu0 0.0
      %1169 = vmatpush1.msra.mxu0 0.0
      %1170 = vmatprep.subr.mxu0 0.0
      %1171 = vmatpush1.msra.mxu0 0.0
      %1172 = vmatprep.subr.mxu0 0.0
      %1173 = vmatpush1.msra.mxu0 0.0
      %1174 = vmatprep.subr.mxu0 0.0
      %1175 = vmatpush1.msra.mxu0 0.0
      %1176 = vmatprep.subr.mxu0 0.0
      %1177 = vmatpush1.msra.mxu0 0.0
      %1178 = vmatprep.subr.mxu0 0.0
      %1179 = vmatpush1.msra.mxu0 0.0
      %1180 = vmatprep.subr.mxu0 0.0
      %1181 = vmatpush1.msra.mxu0 0.0
      %1182 = vmatprep.subr.mxu0 0.0
      %1183 = vmatpush1.msra.mxu0 0.0
      %1184 = vmatprep.subr.mxu0 0.0
      %1185 = vmatpush1.msra.mxu0 0.0
      %1186 = vmatprep.subr.mxu0 0.0
      %1187 = vmatpush1.msra.mxu0 0.0
      %1188 = vmatprep.subr.mxu0 0.0
      %1189 = vmatpush1.msra.mxu0 %v1161
      %1190 = vmatprep.subr.mxu0 0.0
      %1191 = vmatpush1.msra.mxu0 %v1160
      %1192 = vmatprep.subr.mxu0 0.0
      %1193 = vmatpush1.msra.mxu0 %v1159
      %1194 = vmatprep.subr.mxu0 0.0
      %1195 = vmatpush1.msra.mxu0 %v1158
      %1196 = vmatprep.subr.mxu0 0.0
      %1197 = vmatpush2.msra.mxu0 0.0
      %1198 = vmatprep.subr.mxu0 0.0
      %1199 = vmatpush2.msra.mxu0 0.0
      %1200 = vmatprep.subr.mxu0 0.0
      %1201 = vmatpush2.msra.mxu0 0.0
      %1202 = vmatprep.subr.mxu0 0.0
      %1203 = vmatpush2.msra.mxu0 0.0
      %1204 = vmatprep.subr.mxu0 0.0
      %1205 = vmatpush2.msra.mxu0 0.0
      %1206 = vmatprep.subr.mxu0 0.0
      %1207 = vmatpush2.msra.mxu0 0.0
      %1208 = vmatprep.subr.mxu0 0.0
      %1209 = vmatpush2.msra.mxu0 0.0
      %1210 = vmatprep.subr.mxu0 0.0
      %1211 = vmatpush2.msra.mxu0 0.0
      %1212 = vmatprep.subr.mxu0 0.0
      %1213 = vmatpush2.msra.mxu0 0.0
      %1214 = vmatprep.subr.mxu0 0.0
      %1215 = vmatpush2.msra.mxu0 0.0
      %1216 = vmatprep.subr.mxu0 0.0
      %1217 = vmatpush2.msra.mxu0 0.0
      %1218 = vmatprep.subr.mxu0 0.0
      %1219 = vmatpush2.msra.mxu0 0.0
      %1220 = vmatprep.subr.mxu0 0.0
      %1221 = vmatpush2.msra.mxu0 0.0
      %1222 = vmatprep.subr.mxu0 0.0
      %1223 = vmatpush2.msra.mxu0 0.0
      %1224 = vmatprep.subr.mxu0 0.0
      %1225 = vmatpush2.msra.mxu0 0.0
      %1226 = vmatprep.subr.mxu0 0.0
      %1227 = vmatpush2.msra.mxu0 0.0
      %1228 = vmatprep.mubr.f32.mxu0 0.0
      %1229 = vmatmul.mubr.f32.gmra.mxu0 %v1162
      %v1230 = vpop.f32.mrf.mxu0
      %v1231 = vadd.f32 0.0, %v1230
      %v1232 = vpop.f32.mrf.mxu0
      %1233 = vdwg.mxu0
      %v1234 = vadd.f32 %v1157, %v1231
      %v1235 = vxor.u32 %v1234, 2147483648
      %v1236 = vmul.f32 %v1235, 1.442695
      %v1237 = vpow.pop %v1236
      %v1238 = vadd.f32 %v1237, 1.0
      %v1239 = vrcp.pop %v1238
      %v1240 = vmul.f32 1.0, %v1239
      %v1241 = vtanh.pop %v1234
      %v1242 = vmul.f32 %v1240, %v1140
      %1244 = vrot.lane.b32.xlu0 %v1241, 64
      %v1245 = vpop.permute.xlu0 %1244
      %v1247 = vmul.f32 %v1240, %v1245
      %1249 = vrot.lane.b32.xlu0 %v1247, 32
      %v1250 = vpop.permute.xlu0 %1249
      %v1252 = vadd.f32 %v1242, %v1250
      %v1253 = vtanh.pop %v1252
      %1255 = vrot.lane.b32.xlu0 %v1253, 64
      %v1256 = vpop.permute.xlu0 %1255
      %v1258 = vmul.f32 %v1240, %v1256
      %s1259 = smul.u32 %s699, 6
      %s1260 = sadd.s32 %s697, %s1259
      %s1261 = smul.u32 %s1260, 8
      %1263 = vrot.lane.b32.xlu0 %v1258, 32
      %v1264 = vpop.permute.xlu0 %1263
      %s1266 = scalar_lea.vmem %s318, %s1261
      %1267 = vst.msk [vmem:[%s1266] sm:$0xff] %vm346, %v1264
      %s1268 = scalar_lea.vmem [#allocation2], 56
      %v1269 = vld [vmem:[%s1268] sm:$0xff]
      %v1270 = vld [vmem:[%s313] sm:$0xff]
      %v1271 = vld [vmem:[%s313 + $0x8] sm:$0xff]
      %v1272 = vld [vmem:[%s313 + $0x10] sm:$0xff]
      %v1273 = vld [vmem:[%s313 + $0x18] sm:$0xff]
      %v1274 = vsel %vm346, %v1264, 0
      %1276 = vmatprep.subr.mxu0 0.0
      %1277 = vmatpush1.msra.mxu0 0.0
      %1278 = vmatprep.subr.mxu0 0.0
      %1279 = vmatpush1.msra.mxu0 0.0
      %1280 = vmatprep.subr.mxu0 0.0
      %1281 = vmatpush1.msra.mxu0 0.0
      %1282 = vmatprep.subr.mxu0 0.0
      %1283 = vmatpush1.msra.mxu0 0.0
      %1284 = vmatprep.subr.mxu0 0.0
      %1285 = vmatpush1.msra.mxu0 0.0
      %1286 = vmatprep.subr.mxu0 0.0
      %1287 = vmatpush1.msra.mxu0 0.0
      %1288 = vmatprep.subr.mxu0 0.0
      %1289 = vmatpush1.msra.mxu0 0.0
      %1290 = vmatprep.subr.mxu0 0.0
      %1291 = vmatpush1.msra.mxu0 0.0
      %1292 = vmatprep.subr.mxu0 0.0
      %1293 = vmatpush1.msra.mxu0 0.0
      %1294 = vmatprep.subr.mxu0 0.0
      %1295 = vmatpush1.msra.mxu0 0.0
      %1296 = vmatprep.subr.mxu0 0.0
      %1297 = vmatpush1.msra.mxu0 0.0
      %1298 = vmatprep.subr.mxu0 0.0
      %1299 = vmatpush1.msra.mxu0 0.0
      %1300 = vmatprep.subr.mxu0 0.0
      %1301 = vmatpush1.msra.mxu0 %v1273
      %1302 = vmatprep.subr.mxu0 0.0
      %1303 = vmatpush1.msra.mxu0 %v1272
      %1304 = vmatprep.subr.mxu0 0.0
      %1305 = vmatpush1.msra.mxu0 %v1271
      %1306 = vmatprep.subr.mxu0 0.0
      %1307 = vmatpush1.msra.mxu0 %v1270
      %1308 = vmatprep.subr.mxu0 0.0
      %1309 = vmatpush2.msra.mxu0 0.0
      %1310 = vmatprep.subr.mxu0 0.0
      %1311 = vmatpush2.msra.mxu0 0.0
      %1312 = vmatprep.subr.mxu0 0.0
      %1313 = vmatpush2.msra.mxu0 0.0
      %1314 = vmatprep.subr.mxu0 0.0
      %1315 = vmatpush2.msra.mxu0 0.0
      %1316 = vmatprep.subr.mxu0 0.0
      %1317 = vmatpush2.msra.mxu0 0.0
      %1318 = vmatprep.subr.mxu0 0.0
      %1319 = vmatpush2.msra.mxu0 0.0
      %1320 = vmatprep.subr.mxu0 0.0
      %1321 = vmatpush2.msra.mxu0 0.0
      %1322 = vmatprep.subr.mxu0 0.0
      %1323 = vmatpush2.msra.mxu0 0.0
      %1324 = vmatprep.subr.mxu0 0.0
      %1325 = vmatpush2.msra.mxu0 0.0
      %1326 = vmatprep.subr.mxu0 0.0
      %1327 = vmatpush2.msra.mxu0 0.0
      %1328 = vmatprep.subr.mxu0 0.0
      %1329 = vmatpush2.msra.mxu0 0.0
      %1330 = vmatprep.subr.mxu0 0.0
      %1331 = vmatpush2.msra.mxu0 0.0
      %1332 = vmatprep.subr.mxu0 0.0
      %1333 = vmatpush2.msra.mxu0 0.0
      %1334 = vmatprep.subr.mxu0 0.0
      %1335 = vmatpush2.msra.mxu0 0.0
      %1336 = vmatprep.subr.mxu0 0.0
      %1337 = vmatpush2.msra.mxu0 0.0
      %1338 = vmatprep.subr.mxu0 0.0
      %1339 = vmatpush2.msra.mxu0 0.0
      %1340 = vmatprep.mubr.f32.mxu0 0.0
      %1341 = vmatmul.mubr.f32.gmra.mxu0 %v1274
      %v1342 = vpop.f32.mrf.mxu0
      %v1343 = vadd.f32 0.0, %v1342
      %v1344 = vpop.f32.mrf.mxu0
      %1345 = vdwg.mxu0
      %v1346 = vadd.f32 %v1269, %v1343
      %v1347 = vxor.u32 %v1346, 2147483648
      %v1348 = vmul.f32 %v1347, 1.442695
      %v1349 = vpow.pop %v1348
      %v1350 = vadd.f32 %v1349, 1.0
      %v1351 = vrcp.pop %v1350
      %v1352 = vmul.f32 1.0, %v1351
      %v1353 = vtanh.pop %v1346
      %v1354 = vmul.f32 %v1352, %v1252
      %1356 = vrot.lane.b32.xlu0 %v1353, 64
      %v1357 = vpop.permute.xlu0 %1356
      %v1359 = vmul.f32 %v1352, %v1357
      %1361 = vrot.lane.b32.xlu0 %v1359, 32
      %v1362 = vpop.permute.xlu0 %1361
      %v1364 = vadd.f32 %v1354, %v1362
      %v1365 = vtanh.pop %v1364
      %1367 = vrot.lane.b32.xlu0 %v1365, 64
      %v1368 = vpop.permute.xlu0 %1367
      %v1370 = vmul.f32 %v1352, %v1368
      %s1371 = smul.u32 %s699, 7
      %s1372 = sadd.s32 %s697, %s1371
      %s1373 = smul.u32 %s1372, 8
      %1375 = vrot.lane.b32.xlu0 %v1370, 32
      %v1376 = vpop.permute.xlu0 %1375
      %s1378 = scalar_lea.vmem %s318, %s1373
      %1379 = vst.msk [vmem:[%s1378] sm:$0xff] %vm346, %v1376
      %1380 = vst.msk [vmem:[%s322] sm:$0xff] %vm346, %v1376
      %1382 = vrot.lane.b32.xlu0 %v1364, 96
      %v1383 = vpop.permute.xlu0 %1382
      %1385 = vst.msk [vmem:[%s326] sm:$0xff] %vm346, %v1383
      %p1386 = scmp.lt.s32.totalorder %s18, 1
      %s1387 = scalar_select %p1386, %s18, 1
      %s1388 = smul.addr %s1387, 8
      %s1389 = smul.addr %s1388, 8
      %s1390 = scalar_lea.vmem %s4, %s1389
      %p1391 = scmp.lt.s32.totalorder %s18, 1
      %s1392 = scalar_select %p1391, %s18, 1
      %s1393 = smul.addr %s1392, 8
      %s1394 = scalar_lea.vmem %s5, %s1393
      %p1395 = scmp.lt.s32.totalorder %s18, 1
      %s1396 = scalar_select %p1395, %s18, 1
      %s1397 = smul.addr %s1396, 8
      %s1398 = scalar_lea.vmem %s6, %s1397
      // Predicated region
      $region37: #{encoder_forward.1} parent=35 // pred_check
        %p1399 = pneg %p140
      $region38: #{encoder_forward.1} parent=35 // pred_check_branch
        %1401 = sbr.rel (%p1399) target = $region40
      $region39: #{encoder_forward.1} parent=35 // pred_region
        _
      $region40: #{encoder_forward.1} parent=35 // pred_fallthru
        _
      // Predicated region
      $region41: #{encoder_forward.1} parent=35 // pred_check
        %p1402 = pneg %p166
      $region42: #{encoder_forward.1} parent=35 // pred_check_branch
        %1404 = sbr.rel (%p1402) target = $region44
      $region43: #{encoder_forward.1} parent=35 // pred_region
        _
      $region44: #{encoder_forward.1} parent=35 // pred_fallthru
        _
      // Predicated region
      $region45: #{encoder_forward.1} parent=35 // pred_check
        %p1405 = pneg %p192
      $region46: #{encoder_forward.1} parent=35 // pred_check_branch
        %1407 = sbr.rel (%p1405) target = $region48
      $region47: #{encoder_forward.1} parent=35 // pred_region
        _
      $region48: #{encoder_forward.1} parent=35 // pred_fallthru
        _
    $region36: #{encoder_forward.1} parent=5 // pred_fallthru
      _
    %p1408 = scmp.le.s32.totalorder 2, %s13
    // Predicated region
    $region49: #{encoder_forward.1} parent=5 // pred_check
      %p1409 = pneg %p1408
    $region50: #{encoder_forward.1} parent=5 // pred_check_branch
      %1411 = sbr.rel (%p1409) target = $region52
    $region51: #{encoder_forward.1} parent=5 // pred_region
      %s1412 = ssub.s32 %s13, 2
      // Predicated region
      $region53: #{encoder_forward.1} parent=51 // pred_check
        %p1413 = pneg %p146
      $region54: #{encoder_forward.1} parent=51 // pred_check_branch
        %1415 = sbr.rel (%p1413) target = $region56
      $region55: #{encoder_forward.1} parent=51 // pred_region
        %p1416 = scmp.lt.s32.totalorder %s19, 1
        %s1417 = scalar_select %p1416, %s19, 1
        %s1418 = smul.addr %s1417, 8
        %s1419 = smul.addr %s1418, 8
        %s1420 = scalar_lea.vmem %s4, %s1419
      $region56: #{encoder_forward.1} parent=51 // pred_fallthru
        _
      // Predicated region
      $region57: #{encoder_forward.1} parent=51 // pred_check
        %p1421 = pneg %p172
      $region58: #{encoder_forward.1} parent=51 // pred_check_branch
        %1423 = sbr.rel (%p1421) target = $region60
      $region59: #{encoder_forward.1} parent=51 // pred_region
        %p1424 = scmp.lt.s32.totalorder %s19, 1
        %s1425 = scalar_select %p1424, %s19, 1
        %s1426 = smul.addr %s1425, 8
        %s1427 = scalar_lea.vmem %s5, %s1426
      $region60: #{encoder_forward.1} parent=51 // pred_fallthru
        _
      // Predicated region
      $region61: #{encoder_forward.1} parent=51 // pred_check
        %p1428 = pneg %p198
      $region62: #{encoder_forward.1} parent=51 // pred_check_branch
        %1430 = sbr.rel (%p1428) target = $region64
      $region63: #{encoder_forward.1} parent=51 // pred_region
        %p1431 = scmp.lt.s32.totalorder %s19, 1
        %s1432 = scalar_select %p1431, %s19, 1
        %s1433 = smul.addr %s1432, 8
        %s1434 = scalar_lea.vmem %s6, %s1433
      $region64: #{encoder_forward.1} parent=51 // pred_fallthru
        _
    $region52: #{encoder_forward.1} parent=5 // pred_fallthru
      _
  $region6: #{encoder_forward.1} parent=0 // loop_footer
    %s17 = sadd.s32 1, %s13
  $region7: #{encoder_forward.1} parent=0 // loop_footer_branch
    %12 = sbr.rel target = $region3
  $region8: #{encoder_forward.1} parent=0 // loop_exit
    _

</llo_original>
